<compile_context>
chip_gen: v5e
topology: v5e:2x2
jax: 0.10.0
libtpu: 0.0.40
codegen_flags: <defaults>
</compile_context>

<pallas_src>
import functools

import jax
import jax.numpy as jnp
from jax.experimental import pallas as pl
from jax.experimental.pallas import tpu as pltpu

# ---- model hyper-parameters (from the PyTorch script) ----------------------
CONTEXT_LENGTH = 1024
HEAD_SIZE = 16
N_EMBED = 64
N_HEAD = N_EMBED // HEAD_SIZE          # 4
N_BLOCK = 8
FF_DIM = 4 * N_EMBED                   # 256
VOCAB_SIZE = 304                       # synthetic stand-in for tokenizer.vocab_size
VOCAB_PAD = 384                        # next multiple of 128 -> lane-dense logits
LN_EPS = 1e-5

MATMUL_DTYPE = jnp.bfloat16            # MXU operand dtype (f32 accumulation);
                                       # set to jnp.float32 for exact-f32 matmuls.
APPROX_RECIP = True                    # softmax denom via EUP vrcp (~12-bit);
                                       # set False for exact division.


def _layernorm(x, w, b):
    mu = jnp.mean(x, axis=-1, keepdims=True)
    var = jnp.mean((x - mu) ** 2, axis=-1, keepdims=True)
    return (x - mu) * jax.lax.rsqrt(var + LN_EPS) * w + b


def _recip(x):
    return pl.reciprocal(x, approx=True) if APPROX_RECIP else 1.0 / x


def _dot(a, b):
    return jnp.dot(a.astype(MATMUL_DTYPE), b, preferred_element_type=jnp.float32)


# ---------------------------------------------------------------------------
# Fused kernel: all transformer blocks + output head in one pallas_call.
# Grid = (batch, block); activation for the current batch element lives in
# `act_ref` (VMEM scratch) across the block axis.
# ---------------------------------------------------------------------------
def fused_transformer_kernel(
        x_ref,
        ln1_w_ref, ln1_b_ref, wqkv_ref, wlin_ref, blin_ref,
        ln2_w_ref, ln2_b_ref, w1_ref, b1_ref, w2_ref, b2_ref,
        lnf_w_ref, lnf_b_ref, wout_ref, bout_ref,
        logits_ref,
        act_ref,
        *, seq_len, q_tile):
    blk = pl.program_id(1)

    @pl.when(blk == 0)
    def _():
        act_ref[...] = x_ref[...].astype(jnp.float32)

    x = act_ref[...]                                  # (S, C) f32, VMEM-resident

    # ---------------- attention branch (fused QKV, query-tiled softmax) -----
    xn = _layernorm(x, ln1_w_ref[...], ln1_b_ref[...])
    qkv = _dot(xn, wqkv_ref[...])                     # (S, 3C), one wide matmul

    scale = float(N_EMBED) ** -0.5                    # C**-0.5, as in the reference
    q = (qkv[:, 0:N_EMBED] * scale).astype(MATMUL_DTYPE)      # fold scale into q
    k = qkv[:, N_EMBED:2 * N_EMBED].astype(MATMUL_DTYPE)
    v = qkv[:, 2 * N_EMBED:3 * N_EMBED].astype(MATMUL_DTYPE)

    # Hoist per-head K/V lane slices out of the tile loop.
    k_heads = [k[:, h * HEAD_SIZE:(h + 1) * HEAD_SIZE] for h in range(N_HEAD)]
    v_heads = [v[:, h * HEAD_SIZE:(h + 1) * HEAD_SIZE] for h in range(N_HEAD)]

    n_tiles = seq_len // q_tile
    for t in range(n_tiles):                          # static, small trip count
        r0 = t * q_tile
        q_t = q[r0:r0 + q_tile, :]
        heads = []
        # TODO(synk): heads could be batched into one dot_general on an
        # (H, S, D) view; kept as a 4-iteration static loop to avoid major-dim
        # relayouts at head_size=16.
        for h in range(N_HEAD):
            q_th = q_t[:, h * HEAD_SIZE:(h + 1) * HEAD_SIZE]
            s = jax.lax.dot_general(                  # q @ k^T  -> (q_tile, S)
                q_th, k_heads[h], (((1,), (1,)), ((), ())),
                preferred_element_type=jnp.float32)
            # NOTE: masked_fill result is discarded in the PyTorch source, so
            # no causal mask is applied here either (un-masked softmax).
            m = jnp.max(s, axis=-1, keepdims=True)
            e = jnp.exp(s - m)
            p = e * _recip(jnp.sum(e, axis=-1, keepdims=True))
            heads.append(_dot(p, v_heads[h]))         # (q_tile, head_size)

        attn_t = jnp.concatenate(heads, axis=-1)      # (q_tile, C)
        proj_t = _dot(attn_t, wlin_ref[...])          # single (C, C) projection
        x1_t = x[r0:r0 + q_tile, :] + proj_t + blin_ref[...]

        # ------------- feed-forward (Linear-ReLU-Linear-ReLU), same tile ----
        xn2_t = _layernorm(x1_t, ln2_w_ref[...], ln2_b_ref[...])
        h1 = jnp.maximum(_dot(xn2_t, w1_ref[...]) + b1_ref[...], 0.0)
        h2 = jnp.maximum(_dot(h1, w2_ref[...]) + b2_ref[...], 0.0)

        act_ref[r0:r0 + q_tile, :] = x1_t + h2        # carry to next block

    # ---------------- output head, fused into the last grid step ------------
    @pl.when(blk == pl.num_programs(1) - 1)
    def _():
        xf = _layernorm(act_ref[...], lnf_w_ref[...], lnf_b_ref[...])
        logits = _dot(xf, wout_ref[...]) + bout_ref[...]
        logits_ref[...] = logits.astype(logits_ref.dtype)


# ---------------------------------------------------------------------------
# Wrapper
# ---------------------------------------------------------------------------
def mynn_forward(tokens, params, *, q_tile=256):
    """tokens: (B, S) int32. Returns logits (B, S, VOCAB_SIZE). target=None path."""
    B, S = tokens.shape
    C = N_EMBED
    q_tile = min(q_tile, S)
    assert S % q_tile == 0, "sequence length must be divisible by the query tile"

    # Embedding gather + positional add stays in XLA (cheap glue).
    tok_emb = params['token_embed'][tokens]                 # (B,S,C)
    pos_emb = params['pos_embed'][:S]                       # (S,C)
    x = (tok_emb + pos_emb[None, :, :]).astype(jnp.float32)

    def per_block(d1, d2):
        # per-block slice of an (N_BLOCK, d1, d2) stack, leading dim squeezed
        return pl.BlockSpec((None, d1, d2), lambda b, blk: (blk, 0, 0))

    def shared(d1, d2):
        # same block every grid step -> loaded once, stays resident in VMEM
        return pl.BlockSpec((d1, d2), lambda b, blk: (0, 0))

    in_specs = [
        pl.BlockSpec((None, S, C), lambda b, blk: (b, 0, 0)),   # x (per batch)
        per_block(1, C), per_block(1, C),                       # ln1_w, ln1_b
        per_block(C, 3 * C),                                    # wqkv (fused)
        per_block(C, C), per_block(1, C),                       # wlin, blin
        per_block(1, C), per_block(1, C),                       # ln2_w, ln2_b
        per_block(C, FF_DIM), per_block(1, FF_DIM),             # w1, b1
        per_block(FF_DIM, C), per_block(1, C),                  # w2, b2
        shared(1, C), shared(1, C),                             # lnf_w, lnf_b
        shared(C, VOCAB_PAD), shared(1, VOCAB_PAD),             # wout, bout
    ]

    grid_spec = pltpu.PrefetchScalarGridSpec(
        num_scalar_prefetch=0,
        grid=(B, N_BLOCK),
        in_specs=in_specs,
        out_specs=pl.BlockSpec((None, S, VOCAB_PAD), lambda b, blk: (b, 0, 0)),
        scratch_shapes=[pltpu.VMEM((S, C), jnp.float32)],       # resident activation
    )

    kernel = functools.partial(fused_transformer_kernel, seq_len=S, q_tile=q_tile)

    logits_pad = pl.pallas_call(
        kernel,
        out_shape=jax.ShapeDtypeStruct((B, S, VOCAB_PAD), jnp.float32),
        grid_spec=grid_spec,
        compiler_params=pltpu.CompilerParams(
            dimension_semantics=("parallel", "arbitrary"),      # batch || , blocks seq.
            vmem_limit_bytes=32 * 1024 * 1024),
    )(x,
      params['ln1_w'], params['ln1_b'],
      params['wqkv'],
      params['wlin'], params['blin'],
      params['ln2_w'], params['ln2_b'],
      params['w1'], params['b1'], params['w2'], params['b2'],
      params['lnf_w'], params['lnf_b'], params['wout'], params['bout'])

    return logits_pad[:, :, :VOCAB_SIZE]                        # drop lane padding


# ---------------------------------------------------------------------------
# Deterministic parameter construction (synthetic init, stacked per-block)
# ---------------------------------------------------------------------------
def make_params(key):
    def nrm(k, shape, scale=0.02):
        return jax.random.normal(k, shape, dtype=jnp.float32) * scale

    C = N_EMBED
    keys = jax.random.split(key, 9)

    wout = jnp.zeros((C, VOCAB_PAD), jnp.float32)
    wout = wout.at[:, :VOCAB_SIZE].set(nrm(keys[2], (C, VOCAB_SIZE)))

    # Q, K, V weights fused along the output axis: y = x @ W_qkv -> [q | k | v].
    wq = nrm(keys[3], (N_BLOCK, C, C))
    wk = nrm(keys[4], (N_BLOCK, C, C))
    wv = nrm(keys[5], (N_BLOCK, C, C))
    wqkv = jnp.concatenate([wq, wk, wv], axis=-1)               # (N_BLOCK, C, 3C)

    params = {
        'token_embed': nrm(keys[0], (VOCAB_SIZE, C)),
        'pos_embed':   nrm(keys[1], (CONTEXT_LENGTH, C)),
        'lnf_w': jnp.ones((1, C), jnp.float32),
        'lnf_b': jnp.zeros((1, C), jnp.float32),
        'wout': wout.astype(MATMUL_DTYPE),                      # (C, VOCAB_PAD), zero-padded
        'bout': jnp.zeros((1, VOCAB_PAD), jnp.float32),
        # per-block weights stacked along a leading N_BLOCK axis; linear weights
        # are (in, out) so the kernel computes y = x @ W + b directly.
        'ln1_w': jnp.ones((N_BLOCK, 1, C), jnp.float32),
        'ln1_b': jnp.zeros((N_BLOCK, 1, C), jnp.float32),
        'wqkv': wqkv.astype(MATMUL_DTYPE),
        'wlin': nrm(keys[6], (N_BLOCK, C, C)).astype(MATMUL_DTYPE),
        'blin': jnp.zeros((N_BLOCK, 1, C), jnp.float32),
        'ln2_w': jnp.ones((N_BLOCK, 1, C), jnp.float32),
        'ln2_b': jnp.zeros((N_BLOCK, 1, C), jnp.float32),
        'w1': nrm(keys[7], (N_BLOCK, C, FF_DIM)).astype(MATMUL_DTYPE),
        'b1': jnp.zeros((N_BLOCK, 1, FF_DIM), jnp.float32),
        'w2': nrm(keys[8], (N_BLOCK, FF_DIM, C)).astype(MATMUL_DTYPE),
        'b2': jnp.zeros((N_BLOCK, 1, C), jnp.float32),
    }
    return params


if __name__ == "__main__":
    key = jax.random.PRNGKey(0)
    pkey, dkey = jax.random.split(key)
    params = make_params(pkey)

    B, S = 2, 8
    tokens = jax.random.randint(dkey, (B, S), 0, VOCAB_SIZE, dtype=jnp.int32)

    logits = jax.block_until_ready(mynn_forward(tokens, params))
    assert logits.shape == (B, S, VOCAB_SIZE), logits.shape
    assert bool(jnp.all(jnp.isfinite(logits)))
    print("KERNEL_OK")
</pallas_src>

<mosaic_0001>
module attributes {stable_mosaic.version = 11 : i64} {
  func.func @fused_transformer_kernel(%arg0: i32, %arg1: i32, %arg2: memref<1x8x64xf32, #tpu.memory_space<vmem>>, %arg3: memref<1x1x64xf32, #tpu.memory_space<vmem>>, %arg4: memref<1x1x64xf32, #tpu.memory_space<vmem>>, %arg5: memref<1x64x192xbf16, #tpu.memory_space<vmem>>, %arg6: memref<1x64x64xbf16, #tpu.memory_space<vmem>>, %arg7: memref<1x1x64xf32, #tpu.memory_space<vmem>>, %arg8: memref<1x1x64xf32, #tpu.memory_space<vmem>>, %arg9: memref<1x1x64xf32, #tpu.memory_space<vmem>>, %arg10: memref<1x64x256xbf16, #tpu.memory_space<vmem>>, %arg11: memref<1x1x256xf32, #tpu.memory_space<vmem>>, %arg12: memref<1x256x64xbf16, #tpu.memory_space<vmem>>, %arg13: memref<1x1x64xf32, #tpu.memory_space<vmem>>, %arg14: memref<1x64xf32, #tpu.memory_space<vmem>>, %arg15: memref<1x64xf32, #tpu.memory_space<vmem>>, %arg16: memref<64x384xbf16, #tpu.memory_space<vmem>>, %arg17: memref<1x384xf32, #tpu.memory_space<vmem>>, %arg18: memref<1x8x384xf32, #tpu.memory_space<vmem>>, %arg19: memref<8x64xf32, #tpu.memory_space<vmem>>) attributes {dimension_semantics = [#tpu.dimension_semantics<parallel>, #tpu.dimension_semantics<arbitrary>], iteration_bounds = array<i64: 2, 8>, scalar_prefetch = 0 : i64, scratch_operands = 1 : i64, tpu.core_type = #tpu.core_type<tc>, window_params = [{transform_indices = @transform_0, window_bounds = array<i64: 1, 8, 64>}, {transform_indices = @transform_1, window_bounds = array<i64: 1, 1, 64>}, {transform_indices = @transform_2, window_bounds = array<i64: 1, 1, 64>}, {transform_indices = @transform_3, window_bounds = array<i64: 1, 64, 192>}, {transform_indices = @transform_4, window_bounds = array<i64: 1, 64, 64>}, {transform_indices = @transform_5, window_bounds = array<i64: 1, 1, 64>}, {transform_indices = @transform_6, window_bounds = array<i64: 1, 1, 64>}, {transform_indices = @transform_7, window_bounds = array<i64: 1, 1, 64>}, {transform_indices = @transform_8, window_bounds = array<i64: 1, 64, 256>}, {transform_indices = @transform_9, window_bounds = array<i64: 1, 1, 256>}, {transform_indices = @transform_10, window_bounds = array<i64: 1, 256, 64>}, {transform_indices = @transform_11, window_bounds = array<i64: 1, 1, 64>}, {pipeline_mode = #tpu.pipeline_mode<synchronous>, transform_indices = @transform_12, window_bounds = array<i64: 1, 64>}, {pipeline_mode = #tpu.pipeline_mode<synchronous>, transform_indices = @transform_13, window_bounds = array<i64: 1, 64>}, {pipeline_mode = #tpu.pipeline_mode<synchronous>, transform_indices = @transform_14, window_bounds = array<i64: 64, 384>}, {pipeline_mode = #tpu.pipeline_mode<synchronous>, transform_indices = @transform_15, window_bounds = array<i64: 1, 384>}, {transform_indices = @transform_16, window_bounds = array<i64: 1, 8, 384>}]} {
    %c0_i32 = arith.constant 0 : i32
    %0 = arith.cmpi eq, %arg1, %c0_i32 : i32
    %1 = arith.extui %0 : i1 to i32
    %c0_i32_0 = arith.constant 0 : i32
    %2 = arith.cmpi ne, %1, %c0_i32_0 : i32
    scf.if %2 {
      %c0_70 = arith.constant 0 : index
      %c0_71 = arith.constant 0 : index
      %c0_72 = arith.constant 0 : index
      %167 = vector.load %arg2[%c0_70, %c0_71, %c0_72] : memref<1x8x64xf32, #tpu.memory_space<vmem>>, vector<1x8x64xf32>
      %168 = vector.shape_cast %167 : vector<1x8x64xf32> to vector<8x64xf32>
      %c0_73 = arith.constant 0 : index
      %c0_74 = arith.constant 0 : index
      %169 = vector.load %arg19[%c0_73, %c0_74] : memref<8x64xf32, #tpu.memory_space<vmem>>, vector<8x64xf32>
      tpu.vector_store %arg19[%c0_73, %c0_74], %168 {strides = array<i32>} : memref<8x64xf32, #tpu.memory_space<vmem>>, vector<8x64xf32>,
    } else {
    }
    %c0 = arith.constant 0 : index
    %c0_1 = arith.constant 0 : index
    %3 = vector.load %arg19[%c0, %c0_1] : memref<8x64xf32, #tpu.memory_space<vmem>>, vector<8x64xf32>
    %c0_2 = arith.constant 0 : index
    %c0_3 = arith.constant 0 : index
    %c0_4 = arith.constant 0 : index
    %4 = vector.load %arg3[%c0_2, %c0_3, %c0_4] : memref<1x1x64xf32, #tpu.memory_space<vmem>>, vector<1x1x64xf32>
    %5 = vector.shape_cast %4 : vector<1x1x64xf32> to vector<1x64xf32>
    %c0_5 = arith.constant 0 : index
    %c0_6 = arith.constant 0 : index
    %c0_7 = arith.constant 0 : index
    %6 = vector.load %arg4[%c0_5, %c0_6, %c0_7] : memref<1x1x64xf32, #tpu.memory_space<vmem>>, vector<1x1x64xf32>
    %7 = vector.shape_cast %6 : vector<1x1x64xf32> to vector<1x64xf32>
    %cst = arith.constant dense<0.000000e+00> : vector<8xf32>
    %8 = vector.multi_reduction <add>, %3, %cst [1] : vector<8x64xf32> to vector<8xf32>
    %9 = vector.shape_cast %8 : vector<8xf32> to vector<8x1xf32>
    %cst_8 = arith.constant 6.400000e+01 : f32
    %10 = vector.broadcast %cst_8 : f32 to vector<8x1xf32>
    %11 = arith.divf %9, %10 : vector<8x1xf32>
    %12 = vector.broadcast %11 : vector<8x1xf32> to vector<8x64xf32>
    %13 = arith.subf %3, %12 : vector<8x64xf32>
    %14 = arith.mulf %13, %13 : vector<8x64xf32>
    %cst_9 = arith.constant dense<0.000000e+00> : vector<8xf32>
    %15 = vector.multi_reduction <add>, %14, %cst_9 [1] : vector<8x64xf32> to vector<8xf32>
    %16 = vector.shape_cast %15 : vector<8xf32> to vector<8x1xf32>
    %cst_10 = arith.constant 6.400000e+01 : f32
    %17 = vector.broadcast %cst_10 : f32 to vector<8x1xf32>
    %18 = arith.divf %16, %17 : vector<8x1xf32>
    %19 = vector.broadcast %11 : vector<8x1xf32> to vector<8x64xf32>
    %20 = arith.subf %3, %19 : vector<8x64xf32>
    %cst_11 = arith.constant 9.99999974E-6 : f32
    %21 = vector.broadcast %cst_11 : f32 to vector<8x1xf32>
    %22 = arith.addf %18, %21 : vector<8x1xf32>
    %23 = math.rsqrt %22 : vector<8x1xf32>
    %24 = vector.broadcast %23 : vector<8x1xf32> to vector<8x64xf32>
    %25 = arith.mulf %20, %24 : vector<8x64xf32>
    %26 = vector.broadcast %5 : vector<1x64xf32> to vector<8x64xf32>
    %27 = arith.mulf %25, %26 : vector<8x64xf32>
    %28 = vector.broadcast %7 : vector<1x64xf32> to vector<8x64xf32>
    %29 = arith.addf %27, %28 : vector<8x64xf32>
    %c0_12 = arith.constant 0 : index
    %c0_13 = arith.constant 0 : index
    %c0_14 = arith.constant 0 : index
    %30 = vector.load %arg5[%c0_12, %c0_13, %c0_14] : memref<1x64x192xbf16, #tpu.memory_space<vmem>>, vector<1x64x192xbf16>
    %31 = vector.shape_cast %30 : vector<1x64x192xbf16> to vector<64x192xbf16>
    %32 = arith.truncf %29 : vector<8x64xf32> to vector<8x64xbf16>
    %cst_15 = arith.constant dense<0.000000e+00> : vector<8x192xf32>
    %33 = tpu.matmul %32, %31, %cst_15 {dimension_numbers = #tpu.dot_dimension_numbers<[1], [0], [0], [1], [0, 0, 1, 1], [], []>} : vector<8x64xbf16>, vector<64x192xbf16>, vector<8x192xf32> -> vector<8x192xf32>
    %34 = vector.extract_strided_slice %33 {offsets = [0, 0], sizes = [8, 64], strides = [1, 1]} : vector<8x192xf32> to vector<8x64xf32>
    %cst_16 = arith.constant 1.250000e-01 : f32
    %35 = vector.broadcast %cst_16 : f32 to vector<8x64xf32>
    %36 = arith.mulf %34, %35 : vector<8x64xf32>
    %37 = arith.truncf %36 : vector<8x64xf32> to vector<8x64xbf16>
    %38 = vector.extract_strided_slice %33 {offsets = [0, 64], sizes = [8, 64], strides = [1, 1]} : vector<8x192xf32> to vector<8x64xf32>
    %39 = arith.truncf %38 : vector<8x64xf32> to vector<8x64xbf16>
    %40 = vector.extract_strided_slice %33 {offsets = [0, 128], sizes = [8, 64], strides = [1, 1]} : vector<8x192xf32> to vector<8x64xf32>
    %41 = arith.truncf %40 : vector<8x64xf32> to vector<8x64xbf16>
    %42 = vector.extract_strided_slice %39 {offsets = [0, 0], sizes = [8, 16], strides = [1, 1]} : vector<8x64xbf16> to vector<8x16xbf16>
    %43 = vector.extract_strided_slice %39 {offsets = [0, 16], sizes = [8, 16], strides = [1, 1]} : vector<8x64xbf16> to vector<8x16xbf16>
    %44 = vector.extract_strided_slice %39 {offsets = [0, 32], sizes = [8, 16], strides = [1, 1]} : vector<8x64xbf16> to vector<8x16xbf16>
    %45 = vector.extract_strided_slice %39 {offsets = [0, 48], sizes = [8, 16], strides = [1, 1]} : vector<8x64xbf16> to vector<8x16xbf16>
    %46 = vector.extract_strided_slice %41 {offsets = [0, 0], sizes = [8, 16], strides = [1, 1]} : vector<8x64xbf16> to vector<8x16xbf16>
    %47 = vector.extract_strided_slice %41 {offsets = [0, 16], sizes = [8, 16], strides = [1, 1]} : vector<8x64xbf16> to vector<8x16xbf16>
    %48 = vector.extract_strided_slice %41 {offsets = [0, 32], sizes = [8, 16], strides = [1, 1]} : vector<8x64xbf16> to vector<8x16xbf16>
    %49 = vector.extract_strided_slice %41 {offsets = [0, 48], sizes = [8, 16], strides = [1, 1]} : vector<8x64xbf16> to vector<8x16xbf16>
    %50 = vector.extract_strided_slice %37 {offsets = [0, 0], sizes = [8, 16], strides = [1, 1]} : vector<8x64xbf16> to vector<8x16xbf16>
    %cst_17 = arith.constant dense<0.000000e+00> : vector<8x8xf32>
    %51 = tpu.matmul %50, %42, %cst_17 {dimension_numbers = #tpu.dot_dimension_numbers<[1], [1], [0], [0], [0, 0, 1, 0], [], []>} : vector<8x16xbf16>, vector<8x16xbf16>, vector<8x8xf32> -> vector<8x8xf32>
    %cst_18 = arith.constant dense<0xFF800000> : vector<8xf32>
    %52 = vector.multi_reduction <maximumf>, %51, %cst_18 [1] : vector<8x8xf32> to vector<8xf32>
    %53 = vector.shape_cast %52 : vector<8xf32> to vector<8x1xf32>
    %54 = vector.broadcast %53 : vector<8x1xf32> to vector<8x8xf32>
    %55 = arith.subf %51, %54 : vector<8x8xf32>
    %56 = math.exp %55 : vector<8x8xf32>
    %cst_19 = arith.constant dense<0.000000e+00> : vector<8xf32>
    %57 = vector.multi_reduction <add>, %56, %cst_19 [1] : vector<8x8xf32> to vector<8xf32>
    %58 = vector.shape_cast %57 : vector<8xf32> to vector<8x1xf32>
    %59 = tpu.reciprocal %58 {approx = true} : vector<8x1xf32> -> vector<8x1xf32>
    %60 = vector.broadcast %59 : vector<8x1xf32> to vector<8x8xf32>
    %61 = arith.mulf %56, %60 : vector<8x8xf32>
    %62 = arith.truncf %61 : vector<8x8xf32> to vector<8x8xbf16>
    %cst_20 = arith.constant dense<0.000000e+00> : vector<8x16xf32>
    %63 = tpu.matmul %62, %46, %cst_20 {dimension_numbers = #tpu.dot_dimension_numbers<[1], [0], [0], [1], [0, 0, 1, 1], [], []>} : vector<8x8xbf16>, vector<8x16xbf16>, vector<8x16xf32> -> vector<8x16xf32>
    %64 = vector.extract_strided_slice %37 {offsets = [0, 16], sizes = [8, 16], strides = [1, 1]} : vector<8x64xbf16> to vector<8x16xbf16>
    %cst_21 = arith.constant dense<0.000000e+00> : vector<8x8xf32>
    %65 = tpu.matmul %64, %43, %cst_21 {dimension_numbers = #tpu.dot_dimension_numbers<[1], [1], [0], [0], [0, 0, 1, 0], [], []>} : vector<8x16xbf16>, vector<8x16xbf16>, vector<8x8xf32> -> vector<8x8xf32>
    %cst_22 = arith.constant dense<0xFF800000> : vector<8xf32>
    %66 = vector.multi_reduction <maximumf>, %65, %cst_22 [1] : vector<8x8xf32> to vector<8xf32>
    %67 = vector.shape_cast %66 : vector<8xf32> to vector<8x1xf32>
    %68 = vector.broadcast %67 : vector<8x1xf32> to vector<8x8xf32>
    %69 = arith.subf %65, %68 : vector<8x8xf32>
    %70 = math.exp %69 : vector<8x8xf32>
    %cst_23 = arith.constant dense<0.000000e+00> : vector<8xf32>
    %71 = vector.multi_reduction <add>, %70, %cst_23 [1] : vector<8x8xf32> to vector<8xf32>
    %72 = vector.shape_cast %71 : vector<8xf32> to vector<8x1xf32>
    %73 = tpu.reciprocal %72 {approx = true} : vector<8x1xf32> -> vector<8x1xf32>
    %74 = vector.broadcast %73 : vector<8x1xf32> to vector<8x8xf32>
    %75 = arith.mulf %70, %74 : vector<8x8xf32>
    %76 = arith.truncf %75 : vector<8x8xf32> to vector<8x8xbf16>
    %cst_24 = arith.constant dense<0.000000e+00> : vector<8x16xf32>
    %77 = tpu.matmul %76, %47, %cst_24 {dimension_numbers = #tpu.dot_dimension_numbers<[1], [0], [0], [1], [0, 0, 1, 1], [], []>} : vector<8x8xbf16>, vector<8x16xbf16>, vector<8x16xf32> -> vector<8x16xf32>
    %78 = vector.extract_strided_slice %37 {offsets = [0, 32], sizes = [8, 16], strides = [1, 1]} : vector<8x64xbf16> to vector<8x16xbf16>
    %cst_25 = arith.constant dense<0.000000e+00> : vector<8x8xf32>
    %79 = tpu.matmul %78, %44, %cst_25 {dimension_numbers = #tpu.dot_dimension_numbers<[1], [1], [0], [0], [0, 0, 1, 0], [], []>} : vector<8x16xbf16>, vector<8x16xbf16>, vector<8x8xf32> -> vector<8x8xf32>
    %cst_26 = arith.constant dense<0xFF800000> : vector<8xf32>
    %80 = vector.multi_reduction <maximumf>, %79, %cst_26 [1] : vector<8x8xf32> to vector<8xf32>
    %81 = vector.shape_cast %80 : vector<8xf32> to vector<8x1xf32>
    %82 = vector.broadcast %81 : vector<8x1xf32> to vector<8x8xf32>
    %83 = arith.subf %79, %82 : vector<8x8xf32>
    %84 = math.exp %83 : vector<8x8xf32>
    %cst_27 = arith.constant dense<0.000000e+00> : vector<8xf32>
    %85 = vector.multi_reduction <add>, %84, %cst_27 [1] : vector<8x8xf32> to vector<8xf32>
    %86 = vector.shape_cast %85 : vector<8xf32> to vector<8x1xf32>
    %87 = tpu.reciprocal %86 {approx = true} : vector<8x1xf32> -> vector<8x1xf32>
    %88 = vector.broadcast %87 : vector<8x1xf32> to vector<8x8xf32>
    %89 = arith.mulf %84, %88 : vector<8x8xf32>
    %90 = arith.truncf %89 : vector<8x8xf32> to vector<8x8xbf16>
    %cst_28 = arith.constant dense<0.000000e+00> : vector<8x16xf32>
    %91 = tpu.matmul %90, %48, %cst_28 {dimension_numbers = #tpu.dot_dimension_numbers<[1], [0], [0], [1], [0, 0, 1, 1], [], []>} : vector<8x8xbf16>, vector<8x16xbf16>, vector<8x16xf32> -> vector<8x16xf32>
    %92 = vector.extract_strided_slice %37 {offsets = [0, 48], sizes = [8, 16], strides = [1, 1]} : vector<8x64xbf16> to vector<8x16xbf16>
    %cst_29 = arith.constant dense<0.000000e+00> : vector<8x8xf32>
    %93 = tpu.matmul %92, %45, %cst_29 {dimension_numbers = #tpu.dot_dimension_numbers<[1], [1], [0], [0], [0, 0, 1, 0], [], []>} : vector<8x16xbf16>, vector<8x16xbf16>, vector<8x8xf32> -> vector<8x8xf32>
    %cst_30 = arith.constant dense<0xFF800000> : vector<8xf32>
    %94 = vector.multi_reduction <maximumf>, %93, %cst_30 [1] : vector<8x8xf32> to vector<8xf32>
    %95 = vector.shape_cast %94 : vector<8xf32> to vector<8x1xf32>
    %96 = vector.broadcast %95 : vector<8x1xf32> to vector<8x8xf32>
    %97 = arith.subf %93, %96 : vector<8x8xf32>
    %98 = math.exp %97 : vector<8x8xf32>
    %cst_31 = arith.constant dense<0.000000e+00> : vector<8xf32>
    %99 = vector.multi_reduction <add>, %98, %cst_31 [1] : vector<8x8xf32> to vector<8xf32>
    %100 = vector.shape_cast %99 : vector<8xf32> to vector<8x1xf32>
    %101 = tpu.reciprocal %100 {approx = true} : vector<8x1xf32> -> vector<8x1xf32>
    %102 = vector.broadcast %101 : vector<8x1xf32> to vector<8x8xf32>
    %103 = arith.mulf %98, %102 : vector<8x8xf32>
    %104 = arith.truncf %103 : vector<8x8xf32> to vector<8x8xbf16>
    %cst_32 = arith.constant dense<0.000000e+00> : vector<8x16xf32>
    %105 = tpu.matmul %104, %49, %cst_32 {dimension_numbers = #tpu.dot_dimension_numbers<[1], [0], [0], [1], [0, 0, 1, 1], [], []>} : vector<8x8xbf16>, vector<8x16xbf16>, vector<8x16xf32> -> vector<8x16xf32>
    %106 = tpu.concatenate %63, %77, %91, %105 in 1 : vector<8x16xf32>, vector<8x16xf32>, vector<8x16xf32>, vector<8x16xf32> -> vector<8x64xf32>
    %c0_33 = arith.constant 0 : index
    %c0_34 = arith.constant 0 : index
    %c0_35 = arith.constant 0 : index
    %107 = vector.load %arg6[%c0_33, %c0_34, %c0_35] : memref<1x64x64xbf16, #tpu.memory_space<vmem>>, vector<1x64x64xbf16>
    %108 = vector.shape_cast %107 : vector<1x64x64xbf16> to vector<64x64xbf16>
    %109 = arith.truncf %106 : vector<8x64xf32> to vector<8x64xbf16>
    %cst_36 = arith.constant dense<0.000000e+00> : vector<8x64xf32>
    %110 = tpu.matmul %109, %108, %cst_36 {dimension_numbers = #tpu.dot_dimension_numbers<[1], [0], [0], [1], [0, 0, 1, 1], [], []>} : vector<8x64xbf16>, vector<64x64xbf16>, vector<8x64xf32> -> vector<8x64xf32>
    %111 = arith.addf %3, %110 : vector<8x64xf32>
    %c0_37 = arith.constant 0 : index
    %c0_38 = arith.constant 0 : index
    %c0_39 = arith.constant 0 : index
    %112 = vector.load %arg7[%c0_37, %c0_38, %c0_39] : memref<1x1x64xf32, #tpu.memory_space<vmem>>, vector<1x1x64xf32>
    %113 = vector.shape_cast %112 : vector<1x1x64xf32> to vector<1x64xf32>
    %114 = vector.broadcast %113 : vector<1x64xf32> to vector<8x64xf32>
    %115 = arith.addf %111, %114 : vector<8x64xf32>
    %c0_40 = arith.constant 0 : index
    %c0_41 = arith.constant 0 : index
    %c0_42 = arith.constant 0 : index
    %116 = vector.load %arg8[%c0_40, %c0_41, %c0_42] : memref<1x1x64xf32, #tpu.memory_space<vmem>>, vector<1x1x64xf32>
    %117 = vector.shape_cast %116 : vector<1x1x64xf32> to vector<1x64xf32>
    %c0_43 = arith.constant 0 : index
    %c0_44 = arith.constant 0 : index
    %c0_45 = arith.constant 0 : index
    %118 = vector.load %arg9[%c0_43, %c0_44, %c0_45] : memref<1x1x64xf32, #tpu.memory_space<vmem>>, vector<1x1x64xf32>
    %119 = vector.shape_cast %118 : vector<1x1x64xf32> to vector<1x64xf32>
    %cst_46 = arith.constant dense<0.000000e+00> : vector<8xf32>
    %120 = vector.multi_reduction <add>, %115, %cst_46 [1] : vector<8x64xf32> to vector<8xf32>
    %121 = vector.shape_cast %120 : vector<8xf32> to vector<8x1xf32>
    %cst_47 = arith.constant 6.400000e+01 : f32
    %122 = vector.broadcast %cst_47 : f32 to vector<8x1xf32>
    %123 = arith.divf %121, %122 : vector<8x1xf32>
    %124 = vector.broadcast %123 : vector<8x1xf32> to vector<8x64xf32>
    %125 = arith.subf %115, %124 : vector<8x64xf32>
    %126 = arith.mulf %125, %125 : vector<8x64xf32>
    %cst_48 = arith.constant dense<0.000000e+00> : vector<8xf32>
    %127 = vector.multi_reduction <add>, %126, %cst_48 [1] : vector<8x64xf32> to vector<8xf32>
    %128 = vector.shape_cast %127 : vector<8xf32> to vector<8x1xf32>
    %cst_49 = arith.constant 6.400000e+01 : f32
    %129 = vector.broadcast %cst_49 : f32 to vector<8x1xf32>
    %130 = arith.divf %128, %129 : vector<8x1xf32>
    %131 = vector.broadcast %123 : vector<8x1xf32> to vector<8x64xf32>
    %132 = arith.subf %115, %131 : vector<8x64xf32>
    %cst_50 = arith.constant 9.99999974E-6 : f32
    %133 = vector.broadcast %cst_50 : f32 to vector<8x1xf32>
    %134 = arith.addf %130, %133 : vector<8x1xf32>
    %135 = math.rsqrt %134 : vector<8x1xf32>
    %136 = vector.broadcast %135 : vector<8x1xf32> to vector<8x64xf32>
    %137 = arith.mulf %132, %136 : vector<8x64xf32>
    %138 = vector.broadcast %117 : vector<1x64xf32> to vector<8x64xf32>
    %139 = arith.mulf %137, %138 : vector<8x64xf32>
    %140 = vector.broadcast %119 : vector<1x64xf32> to vector<8x64xf32>
    %141 = arith.addf %139, %140 : vector<8x64xf32>
    %c0_51 = arith.constant 0 : index
    %c0_52 = arith.constant 0 : index
    %c0_53 = arith.constant 0 : index
    %142 = vector.load %arg10[%c0_51, %c0_52, %c0_53] : memref<1x64x256xbf16, #tpu.memory_space<vmem>>, vector<1x64x256xbf16>
    %143 = vector.shape_cast %142 : vector<1x64x256xbf16> to vector<64x256xbf16>
    %144 = arith.truncf %141 : vector<8x64xf32> to vector<8x64xbf16>
    %cst_54 = arith.constant dense<0.000000e+00> : vector<8x256xf32>
    %145 = tpu.matmul %144, %143, %cst_54 {dimension_numbers = #tpu.dot_dimension_numbers<[1], [0], [0], [1], [0, 0, 1, 1], [], []>} : vector<8x64xbf16>, vector<64x256xbf16>, vector<8x256xf32> -> vector<8x256xf32>
    %c0_55 = arith.constant 0 : index
    %c0_56 = arith.constant 0 : index
    %c0_57 = arith.constant 0 : index
    %146 = vector.load %arg11[%c0_55, %c0_56, %c0_57] : memref<1x1x256xf32, #tpu.memory_space<vmem>>, vector<1x1x256xf32>
    %147 = vector.shape_cast %146 : vector<1x1x256xf32> to vector<1x256xf32>
    %148 = vector.broadcast %147 : vector<1x256xf32> to vector<8x256xf32>
    %149 = arith.addf %145, %148 : vector<8x256xf32>
    %cst_58 = arith.constant 0.000000e+00 : f32
    %150 = vector.broadcast %cst_58 : f32 to vector<8x256xf32>
    %151 = arith.maximumf %149, %150 : vector<8x256xf32>
    %c0_59 = arith.constant 0 : index
    %c0_60 = arith.constant 0 : index
    %c0_61 = arith.constant 0 : index
    %152 = vector.load %arg12[%c0_59, %c0_60, %c0_61] : memref<1x256x64xbf16, #tpu.memory_space<vmem>>, vector<1x256x64xbf16>
    %153 = vector.shape_cast %152 : vector<1x256x64xbf16> to vector<256x64xbf16>
    %154 = arith.truncf %151 : vector<8x256xf32> to vector<8x256xbf16>
    %cst_62 = arith.constant dense<0.000000e+00> : vector<8x64xf32>
    %155 = tpu.matmul %154, %153, %cst_62 {dimension_numbers = #tpu.dot_dimension_numbers<[1], [0], [0], [1], [0, 0, 1, 1], [], []>} : vector<8x256xbf16>, vector<256x64xbf16>, vector<8x64xf32> -> vector<8x64xf32>
    %c0_63 = arith.constant 0 : index
    %c0_64 = arith.constant 0 : index
    %c0_65 = arith.constant 0 : index
    %156 = vector.load %arg13[%c0_63, %c0_64, %c0_65] : memref<1x1x64xf32, #tpu.memory_space<vmem>>, vector<1x1x64xf32>
    %157 = vector.shape_cast %156 : vector<1x1x64xf32> to vector<1x64xf32>
    %158 = vector.broadcast %157 : vector<1x64xf32> to vector<8x64xf32>
    %159 = arith.addf %155, %158 : vector<8x64xf32>
    %cst_66 = arith.constant 0.000000e+00 : f32
    %160 = vector.broadcast %cst_66 : f32 to vector<8x64xf32>
    %161 = arith.maximumf %159, %160 : vector<8x64xf32>
    %162 = arith.addf %115, %161 : vector<8x64xf32>
    %c0_67 = arith.constant 0 : index
    %c0_68 = arith.constant 0 : index
    %163 = vector.load %arg19[%c0_67, %c0_68] : memref<8x64xf32, #tpu.memory_space<vmem>>, vector<8x64xf32>
    tpu.vector_store %arg19[%c0_67, %c0_68], %162 {strides = array<i32>} : memref<8x64xf32, #tpu.memory_space<vmem>>, vector<8x64xf32>,
    %c7_i32 = arith.constant 7 : i32
    %164 = arith.cmpi eq, %arg1, %c7_i32 : i32
    %165 = arith.extui %164 : i1 to i32
    %c0_i32_69 = arith.constant 0 : i32
    %166 = arith.cmpi ne, %165, %c0_i32_69 : i32
    scf.if %166 {
      %c0_70 = arith.constant 0 : index
      %c0_71 = arith.constant 0 : index
      %167 = vector.load %arg19[%c0_70, %c0_71] : memref<8x64xf32, #tpu.memory_space<vmem>>, vector<8x64xf32>
      %c0_72 = arith.constant 0 : index
      %c0_73 = arith.constant 0 : index
      %168 = vector.load %arg14[%c0_72, %c0_73] : memref<1x64xf32, #tpu.memory_space<vmem>>, vector<1x64xf32>
      %c0_74 = arith.constant 0 : index
      %c0_75 = arith.constant 0 : index
      %169 = vector.load %arg15[%c0_74, %c0_75] : memref<1x64xf32, #tpu.memory_space<vmem>>, vector<1x64xf32>
      %cst_76 = arith.constant dense<0.000000e+00> : vector<8xf32>
      %170 = vector.multi_reduction <add>, %167, %cst_76 [1] : vector<8x64xf32> to vector<8xf32>
      %171 = vector.shape_cast %170 : vector<8xf32> to vector<8x1xf32>
      %cst_77 = arith.constant 6.400000e+01 : f32
      %172 = vector.broadcast %cst_77 : f32 to vector<8x1xf32>
      %173 = arith.divf %171, %172 : vector<8x1xf32>
      %174 = vector.broadcast %173 : vector<8x1xf32> to vector<8x64xf32>
      %175 = arith.subf %167, %174 : vector<8x64xf32>
      %176 = arith.mulf %175, %175 : vector<8x64xf32>
      %cst_78 = arith.constant dense<0.000000e+00> : vector<8xf32>
      %177 = vector.multi_reduction <add>, %176, %cst_78 [1] : vector<8x64xf32> to vector<8xf32>
      %178 = vector.shape_cast %177 : vector<8xf32> to vector<8x1xf32>
      %cst_79 = arith.constant 6.400000e+01 : f32
      %179 = vector.broadcast %cst_79 : f32 to vector<8x1xf32>
      %180 = arith.divf %178, %179 : vector<8x1xf32>
      %181 = vector.broadcast %173 : vector<8x1xf32> to vector<8x64xf32>
      %182 = arith.subf %167, %181 : vector<8x64xf32>
      %cst_80 = arith.constant 9.99999974E-6 : f32
      %183 = vector.broadcast %cst_80 : f32 to vector<8x1xf32>
      %184 = arith.addf %180, %183 : vector<8x1xf32>
      %185 = math.rsqrt %184 : vector<8x1xf32>
      %186 = vector.broadcast %185 : vector<8x1xf32> to vector<8x64xf32>
      %187 = arith.mulf %182, %186 : vector<8x64xf32>
      %188 = vector.broadcast %168 : vector<1x64xf32> to vector<8x64xf32>
      %189 = arith.mulf %187, %188 : vector<8x64xf32>
      %190 = vector.broadcast %169 : vector<1x64xf32> to vector<8x64xf32>
      %191 = arith.addf %189, %190 : vector<8x64xf32>
      %c0_81 = arith.constant 0 : index
      %c0_82 = arith.constant 0 : index
      %192 = vector.load %arg16[%c0_81, %c0_82] : memref<64x384xbf16, #tpu.memory_space<vmem>>, vector<64x384xbf16>
      %193 = arith.truncf %191 : vector<8x64xf32> to vector<8x64xbf16>
      %cst_83 = arith.constant dense<0.000000e+00> : vector<8x384xf32>
      %194 = tpu.matmul %193, %192, %cst_83 {dimension_numbers = #tpu.dot_dimension_numbers<[1], [0], [0], [1], [0, 0, 1, 1], [], []>} : vector<8x64xbf16>, vector<64x384xbf16>, vector<8x384xf32> -> vector<8x384xf32>
      %c0_84 = arith.constant 0 : index
      %c0_85 = arith.constant 0 : index
      %195 = vector.load %arg17[%c0_84, %c0_85] : memref<1x384xf32, #tpu.memory_space<vmem>>, vector<1x384xf32>
      %196 = vector.broadcast %195 : vector<1x384xf32> to vector<8x384xf32>
      %197 = arith.addf %194, %196 : vector<8x384xf32>
      %c0_86 = arith.constant 0 : index
      %c0_87 = arith.constant 0 : index
      %c0_88 = arith.constant 0 : index
      %198 = vector.load %arg18[%c0_86, %c0_87, %c0_88] : memref<1x8x384xf32, #tpu.memory_space<vmem>>, vector<1x8x384xf32>
      %199 = vector.shape_cast %198 : vector<1x8x384xf32> to vector<8x384xf32>
      %200 = vector.shape_cast %197 : vector<8x384xf32> to vector<1x8x384xf32>
      tpu.vector_store %arg18[%c0_86, %c0_87, %c0_88], %200 {strides = array<i32>} : memref<1x8x384xf32, #tpu.memory_space<vmem>>, vector<1x8x384xf32>,
    } else {
    }
    return
  }
  func.func @transform_0(%arg0: i32, %arg1: i32) -> (i32, i32, i32) {
    %c0_i32 = arith.constant 0 : i32
    %c0_i32_0 = arith.constant 0 : i32
    %c0_i32_1 = arith.constant 0 : i32
    return %arg0, %c0_i32, %c0_i32_0 : i32, i32, i32
  }
  func.func @transform_1(%arg0: i32, %arg1: i32) -> (i32, i32, i32) {
    %c0_i32 = arith.constant 0 : i32
    %c0_i32_0 = arith.constant 0 : i32
    %c0_i32_1 = arith.constant 0 : i32
    return %arg1, %c0_i32, %c0_i32_0 : i32, i32, i32
  }
  func.func @transform_2(%arg0: i32, %arg1: i32) -> (i32, i32, i32) {
    %c0_i32 = arith.constant 0 : i32
    %c0_i32_0 = arith.constant 0 : i32
    %c0_i32_1 = arith.constant 0 : i32
    return %arg1, %c0_i32, %c0_i32_0 : i32, i32, i32
  }
  func.func @transform_3(%arg0: i32, %arg1: i32) -> (i32, i32, i32) {
    %c0_i32 = arith.constant 0 : i32
    %c0_i32_0 = arith.constant 0 : i32
    %c0_i32_1 = arith.constant 0 : i32
    return %arg1, %c0_i32, %c0_i32_0 : i32, i32, i32
  }
  func.func @transform_4(%arg0: i32, %arg1: i32) -> (i32, i32, i32) {
    %c0_i32 = arith.constant 0 : i32
    %c0_i32_0 = arith.constant 0 : i32
    %c0_i32_1 = arith.constant 0 : i32
    return %arg1, %c0_i32, %c0_i32_0 : i32, i32, i32
  }
  func.func @transform_5(%arg0: i32, %arg1: i32) -> (i32, i32, i32) {
    %c0_i32 = arith.constant 0 : i32
    %c0_i32_0 = arith.constant 0 : i32
    %c0_i32_1 = arith.constant 0 : i32
    return %arg1, %c0_i32, %c0_i32_0 : i32, i32, i32
  }
  func.func @transform_6(%arg0: i32, %arg1: i32) -> (i32, i32, i32) {
    %c0_i32 = arith.constant 0 : i32
    %c0_i32_0 = arith.constant 0 : i32
    %c0_i32_1 = arith.constant 0 : i32
    return %arg1, %c0_i32, %c0_i32_0 : i32, i32, i32
  }
  func.func @transform_7(%arg0: i32, %arg1: i32) -> (i32, i32, i32) {
    %c0_i32 = arith.constant 0 : i32
    %c0_i32_0 = arith.constant 0 : i32
    %c0_i32_1 = arith.constant 0 : i32
    return %arg1, %c0_i32, %c0_i32_0 : i32, i32, i32
  }
  func.func @transform_8(%arg0: i32, %arg1: i32) -> (i32, i32, i32) {
    %c0_i32 = arith.constant 0 : i32
    %c0_i32_0 = arith.constant 0 : i32
    %c0_i32_1 = arith.constant 0 : i32
    return %arg1, %c0_i32, %c0_i32_0 : i32, i32, i32
  }
  func.func @transform_9(%arg0: i32, %arg1: i32) -> (i32, i32, i32) {
    %c0_i32 = arith.constant 0 : i32
    %c0_i32_0 = arith.constant 0 : i32
    %c0_i32_1 = arith.constant 0 : i32
    return %arg1, %c0_i32, %c0_i32_0 : i32, i32, i32
  }
  func.func @transform_10(%arg0: i32, %arg1: i32) -> (i32, i32, i32) {
    %c0_i32 = arith.constant 0 : i32
    %c0_i32_0 = arith.constant 0 : i32
    %c0_i32_1 = arith.constant 0 : i32
    return %arg1, %c0_i32, %c0_i32_0 : i32, i32, i32
  }
  func.func @transform_11(%arg0: i32, %arg1: i32) -> (i32, i32, i32) {
    %c0_i32 = arith.constant 0 : i32
    %c0_i32_0 = arith.constant 0 : i32
    %c0_i32_1 = arith.constant 0 : i32
    return %arg1, %c0_i32, %c0_i32_0 : i32, i32, i32
  }
  func.func @transform_12(%arg0: i32, %arg1: i32) -> (i32, i32) {
    %c0_i32 = arith.constant 0 : i32
    %c0_i32_0 = arith.constant 0 : i32
    %c0_i32_1 = arith.constant 0 : i32
    return %c0_i32, %c0_i32_0 : i32, i32
  }
  func.func @transform_13(%arg0: i32, %arg1: i32) -> (i32, i32) {
    %c0_i32 = arith.constant 0 : i32
    %c0_i32_0 = arith.constant 0 : i32
    %c0_i32_1 = arith.constant 0 : i32
    return %c0_i32, %c0_i32_0 : i32, i32
  }
  func.func @transform_14(%arg0: i32, %arg1: i32) -> (i32, i32) {
    %c0_i32 = arith.constant 0 : i32
    %c0_i32_0 = arith.constant 0 : i32
    %c0_i32_1 = arith.constant 0 : i32
    return %c0_i32, %c0_i32_0 : i32, i32
  }
  func.func @transform_15(%arg0: i32, %arg1: i32) -> (i32, i32) {
    %c0_i32 = arith.constant 0 : i32
    %c0_i32_0 = arith.constant 0 : i32
    %c0_i32_1 = arith.constant 0 : i32
    return %c0_i32, %c0_i32_0 : i32, i32
  }
  func.func @transform_16(%arg0: i32, %arg1: i32) -> (i32, i32, i32) {
    %c0_i32 = arith.constant 0 : i32
    %c0_i32_0 = arith.constant 0 : i32
    %c0_i32_1 = arith.constant 0 : i32
    return %arg0, %c0_i32, %c0_i32_0 : i32, i32, i32
  }
}

</mosaic_0001>

<llo_original>
// kernel: tpu_custom_call.1
$region0: #{tpu_custom_call.1}
  #allocation0 [shape = 'u32[]', space=smem, size = 0x4, offset = 0x4, fixed_abs, tag = 'smem constant byte address 0x4 - core index']
  #allocation1 [shape = 'u32[72,128]{1,0:T(1,128)}', space=vmem, size = 0x9000, scoped, tag = 'internal scratch']
  #allocation2 [shape = 'f32[8,64]{1,0:T(8,128)}', space=vmem, size = 0x1000, scoped, tag = 'scratch operand']
  %s0 = inlined_call_operand.vmem [shape: f32[2,8,64], index: 0, kind: input, shape index: {}]
  %s1 = inlined_call_operand.vmem [shape: f32[8,1,64], index: 1, kind: input, shape index: {}]
  %s2 = inlined_call_operand.vmem [shape: f32[8,1,64], index: 2, kind: input, shape index: {}]
  %s3 = inlined_call_operand.vmem [shape: bf16[8,64,192], index: 3, kind: input, shape index: {}]
  %s4 = inlined_call_operand.vmem [shape: bf16[8,64,64], index: 4, kind: input, shape index: {}]
  %s5 = inlined_call_operand.vmem [shape: f32[8,1,64], index: 5, kind: input, shape index: {}]
  %s6 = inlined_call_operand.vmem [shape: f32[8,1,64], index: 6, kind: input, shape index: {}]
  %s7 = inlined_call_operand.vmem [shape: f32[8,1,64], index: 7, kind: input, shape index: {}]
  %s8 = inlined_call_operand.vmem [shape: bf16[8,64,256], index: 8, kind: input, shape index: {}]
  %s9 = inlined_call_operand.vmem [shape: f32[8,1,256], index: 9, kind: input, shape index: {}]
  %s10 = inlined_call_operand.vmem [shape: bf16[8,256,64], index: 10, kind: input, shape index: {}]
  %s11 = inlined_call_operand.vmem [shape: f32[8,1,64], index: 11, kind: input, shape index: {}]
  %s12 = inlined_call_operand.vmem [shape: f32[1,64], index: 12, kind: input, shape index: {}]
  %s13 = inlined_call_operand.vmem [shape: f32[1,64], index: 13, kind: input, shape index: {}]
  %s14 = inlined_call_operand.vmem [shape: bf16[64,384], index: 14, kind: input, shape index: {}]
  %s15 = inlined_call_operand.vmem [shape: f32[1,384], index: 15, kind: input, shape index: {}]
  %s16 = inlined_call_operand.hbm [shape: f32[2,8,384], index: 16, kind: output, shape index: {}]
  %s17 = sld [smem:[#allocation0]]
  $region105: #{tpu_custom_call.1} parent=0
    _
  %s19 = ssub.s32 1, %s17
  %s20 = scalar_select 0, %s19, %s17
  $region1: #{tpu_custom_call.1} parent=0
    #allocation3 [shape = 'u8[24576]{0}', space=vmem, size = 0x6000, scoped, tag = 'output window, operand 0']
    #allocation4 [shape = 's32[2]{0}', space=sflag, size = 0x8, scoped, tag = 'scoped memory for tpu_custom_call.1']
    %21 = vsyncpa [#allocation4], 0
    %s22 = scalar_lea.sflag [#allocation4], 1
    %23 = vsyncpa %s22, 0
    loop: start=0, step=1, limit=18
    $region2: #{tpu_custom_call.1} parent=1 // loop_pre_header
      _
    $region3: #{tpu_custom_call.1} parent=1 // loop_header
      %s25 = sphi 0, %s29
      %p26 = scmp.ge.s32.totalorder %s25, 18
      %s32 = sphi 0, %s44
      %s33 = sphi 0, %s40
      %s34 = sphi 0, %s32
      %s35 = sphi 0, %s33
      %s36 = sphi 0, %s34
      %s37 = sphi 0, %s35
      %s47 = sphi 0, %s49
      %s50 = sphi 0, %s47
      %s51 = sphi 0, %s50
      %s67 = sphi 0, %s51
      %s73 = sphi 0, %s75
      %s76 = sphi 0, %s73
      %s77 = sphi 0, %s76
      %s93 = sphi 0, %s77
      %s99 = sphi 0, %s101
      %s102 = sphi 0, %s99
      %s103 = sphi 0, %s102
      %s119 = sphi 0, %s103
      %s125 = sphi 0, %s127
      %s128 = sphi 0, %s125
      %s129 = sphi 0, %s128
      %s145 = sphi 0, %s129
      %s151 = sphi 0, %s153
      %s154 = sphi 0, %s151
      %s155 = sphi 0, %s154
      %s171 = sphi 0, %s155
      %s177 = sphi 0, %s179
      %s180 = sphi 0, %s177
      %s181 = sphi 0, %s180
      %s197 = sphi 0, %s181
      %s203 = sphi 0, %s205
      %s206 = sphi 0, %s203
      %s207 = sphi 0, %s206
      %s223 = sphi 0, %s207
      %s229 = sphi 0, %s231
      %s232 = sphi 0, %s229
      %s233 = sphi 0, %s232
      %s249 = sphi 0, %s233
      %s255 = sphi 0, %s257
      %s258 = sphi 0, %s255
      %s259 = sphi 0, %s258
      %s275 = sphi 0, %s259
      %s281 = sphi 0, %s283
      %s284 = sphi 0, %s281
      %s285 = sphi 0, %s284
      %s301 = sphi 0, %s285
      %s307 = sphi 0, %s309
      %s310 = sphi 0, %s307
      %s311 = sphi 0, %s310
      %s327 = sphi 0, %s311
      %s333 = sphi 0, %s335
      %s336 = sphi 0, %s333
      %s337 = sphi 0, %s336
      %s353 = sphi 0, %s337
      %s357 = sphi 0, %s357
      %s359 = sphi 0, %s357
      %s360 = sphi 0, %s359
      %s374 = sphi 0, %s360
      %s378 = sphi 0, %s378
      %s380 = sphi 0, %s378
      %s381 = sphi 0, %s380
      %s395 = sphi 0, %s381
      %s399 = sphi 0, %s399
      %s401 = sphi 0, %s399
      %s402 = sphi 0, %s401
      %s416 = sphi 0, %s402
      %s420 = sphi 0, %s420
      %s422 = sphi 0, %s420
      %s423 = sphi 0, %s422
      %s437 = sphi 0, %s423
      %s443 = sphi 0, %s445
      %s446 = sphi 0, %s443
      %s447 = sphi 0, %s446
      %s463 = sphi 0, %s447
    $region4: #{tpu_custom_call.1} parent=1 // loop_header_branch
      %28 = sbr.rel (%p26) target = $region8
    $region5: #{tpu_custom_call.1} parent=1 // loop_body
      %s30 = ssub.s32 %s25, 1
      %s31 = ssub.s32 %s25, 2
      %s38 = sadd.s32 1, %s33
      %p39 = scmp.ge.s32.totalorder %s38, 8
      %s40 = scalar_select %p39, 0, %s38
      %s41 = sadd.s32 1, %s32
      %s42 = scalar_select %p39, %s41, %s32
      %p43 = scmp.ge.s32.totalorder %s42, 2
      %s44 = scalar_select %p43, 0, %s42
      %s45 = ssub.s32 %s32, %s44
      %p46 = scmp.eq.s32.totalorder %s45, 0
      %s48 = sadd.s32 %s47, 1
      %s49 = scalar_select %p46, %s47, %s48
      %p52 = pneg %p46
      %p53 = scmp.eq.s32.totalorder %s25, 15
      %p54 = por %p52, %p53
      %p55 = scmp.ne.s32.totalorder %s47, %s50
      %p56 = scmp.eq.s32.totalorder %s25, 0
      %p57 = por %p55, %p56
      %p58 = scmp.ne.s32.totalorder %s47, %s50
      %p59 = scmp.eq.s32.totalorder %s30, 15
      %p60 = por %p58, %p59
      %p61 = scmp.ne.s32.totalorder %s50, %s51
      %p62 = scmp.eq.s32.totalorder %s30, 0
      %p63 = por %p61, %p62
      %p64 = scmp.ne.s32.totalorder %s50, %s51
      %p65 = scmp.eq.s32.totalorder %s31, 15
      %p66 = por %p64, %p65
      %p68 = scmp.ne.s32.totalorder %s51, %s67
      %p69 = scmp.eq.s32.totalorder %s31, 0
      %p70 = por %p68, %p69
      %s71 = ssub.s32 %s33, %s40
      %p72 = scmp.eq.s32.totalorder %s71, 0
      %s74 = sadd.s32 %s73, 1
      %s75 = scalar_select %p72, %s73, %s74
      %p78 = pneg %p72
      %p79 = scmp.eq.s32.totalorder %s25, 15
      %p80 = por %p78, %p79
      %p81 = scmp.ne.s32.totalorder %s73, %s76
      %p82 = scmp.eq.s32.totalorder %s25, 0
      %p83 = por %p81, %p82
      %p84 = scmp.ne.s32.totalorder %s73, %s76
      %p85 = scmp.eq.s32.totalorder %s30, 15
      %p86 = por %p84, %p85
      %p87 = scmp.ne.s32.totalorder %s76, %s77
      %p88 = scmp.eq.s32.totalorder %s30, 0
      %p89 = por %p87, %p88
      %p90 = scmp.ne.s32.totalorder %s76, %s77
      %p91 = scmp.eq.s32.totalorder %s31, 15
      %p92 = por %p90, %p91
      %p94 = scmp.ne.s32.totalorder %s77, %s93
      %p95 = scmp.eq.s32.totalorder %s31, 0
      %p96 = por %p94, %p95
      %s97 = ssub.s32 %s33, %s40
      %p98 = scmp.eq.s32.totalorder %s97, 0
      %s100 = sadd.s32 %s99, 1
      %s101 = scalar_select %p98, %s99, %s100
      %p104 = pneg %p98
      %p105 = scmp.eq.s32.totalorder %s25, 15
      %p106 = por %p104, %p105
      %p107 = scmp.ne.s32.totalorder %s99, %s102
      %p108 = scmp.eq.s32.totalorder %s25, 0
      %p109 = por %p107, %p108
      %p110 = scmp.ne.s32.totalorder %s99, %s102
      %p111 = scmp.eq.s32.totalorder %s30, 15
      %p112 = por %p110, %p111
      %p113 = scmp.ne.s32.totalorder %s102, %s103
      %p114 = scmp.eq.s32.totalorder %s30, 0
      %p115 = por %p113, %p114
      %p116 = scmp.ne.s32.totalorder %s102, %s103
      %p117 = scmp.eq.s32.totalorder %s31, 15
      %p118 = por %p116, %p117
      %p120 = scmp.ne.s32.totalorder %s103, %s119
      %p121 = scmp.eq.s32.totalorder %s31, 0
      %p122 = por %p120, %p121
      %s123 = ssub.s32 %s33, %s40
      %p124 = scmp.eq.s32.totalorder %s123, 0
      %s126 = sadd.s32 %s125, 1
      %s127 = scalar_select %p124, %s125, %s126
      %p130 = pneg %p124
      %p131 = scmp.eq.s32.totalorder %s25, 15
      %p132 = por %p130, %p131
      %p133 = scmp.ne.s32.totalorder %s125, %s128
      %p134 = scmp.eq.s32.totalorder %s25, 0
      %p135 = por %p133, %p134
      %p136 = scmp.ne.s32.totalorder %s125, %s128
      %p137 = scmp.eq.s32.totalorder %s30, 15
      %p138 = por %p136, %p137
      %p139 = scmp.ne.s32.totalorder %s128, %s129
      %p140 = scmp.eq.s32.totalorder %s30, 0
      %p141 = por %p139, %p140
      %p142 = scmp.ne.s32.totalorder %s128, %s129
      %p143 = scmp.eq.s32.totalorder %s31, 15
      %p144 = por %p142, %p143
      %p146 = scmp.ne.s32.totalorder %s129, %s145
      %p147 = scmp.eq.s32.totalorder %s31, 0
      %p148 = por %p146, %p147
      %s149 = ssub.s32 %s33, %s40
      %p150 = scmp.eq.s32.totalorder %s149, 0
      %s152 = sadd.s32 %s151, 1
      %s153 = scalar_select %p150, %s151, %s152
      %p156 = pneg %p150
      %p157 = scmp.eq.s32.totalorder %s25, 15
      %p158 = por %p156, %p157
      %p159 = scmp.ne.s32.totalorder %s151, %s154
      %p160 = scmp.eq.s32.totalorder %s25, 0
      %p161 = por %p159, %p160
      %p162 = scmp.ne.s32.totalorder %s151, %s154
      %p163 = scmp.eq.s32.totalorder %s30, 15
      %p164 = por %p162, %p163
      %p165 = scmp.ne.s32.totalorder %s154, %s155
      %p166 = scmp.eq.s32.totalorder %s30, 0
      %p167 = por %p165, %p166
      %p168 = scmp.ne.s32.totalorder %s154, %s155
      %p169 = scmp.eq.s32.totalorder %s31, 15
      %p170 = por %p168, %p169
      %p172 = scmp.ne.s32.totalorder %s155, %s171
      %p173 = scmp.eq.s32.totalorder %s31, 0
      %p174 = por %p172, %p173
      %s175 = ssub.s32 %s33, %s40
      %p176 = scmp.eq.s32.totalorder %s175, 0
      %s178 = sadd.s32 %s177, 1
      %s179 = scalar_select %p176, %s177, %s178
      %p182 = pneg %p176
      %p183 = scmp.eq.s32.totalorder %s25, 15
      %p184 = por %p182, %p183
      %p185 = scmp.ne.s32.totalorder %s177, %s180
      %p186 = scmp.eq.s32.totalorder %s25, 0
      %p187 = por %p185, %p186
      %p188 = scmp.ne.s32.totalorder %s177, %s180
      %p189 = scmp.eq.s32.totalorder %s30, 15
      %p190 = por %p188, %p189
      %p191 = scmp.ne.s32.totalorder %s180, %s181
      %p192 = scmp.eq.s32.totalorder %s30, 0
      %p193 = por %p191, %p192
      %p194 = scmp.ne.s32.totalorder %s180, %s181
      %p195 = scmp.eq.s32.totalorder %s31, 15
      %p196 = por %p194, %p195
      %p198 = scmp.ne.s32.totalorder %s181, %s197
      %p199 = scmp.eq.s32.totalorder %s31, 0
      %p200 = por %p198, %p199
      %s201 = ssub.s32 %s33, %s40
      %p202 = scmp.eq.s32.totalorder %s201, 0
      %s204 = sadd.s32 %s203, 1
      %s205 = scalar_select %p202, %s203, %s204
      %p208 = pneg %p202
      %p209 = scmp.eq.s32.totalorder %s25, 15
      %p210 = por %p208, %p209
      %p211 = scmp.ne.s32.totalorder %s203, %s206
      %p212 = scmp.eq.s32.totalorder %s25, 0
      %p213 = por %p211, %p212
      %p214 = scmp.ne.s32.totalorder %s203, %s206
      %p215 = scmp.eq.s32.totalorder %s30, 15
      %p216 = por %p214, %p215
      %p217 = scmp.ne.s32.totalorder %s206, %s207
      %p218 = scmp.eq.s32.totalorder %s30, 0
      %p219 = por %p217, %p218
      %p220 = scmp.ne.s32.totalorder %s206, %s207
      %p221 = scmp.eq.s32.totalorder %s31, 15
      %p222 = por %p220, %p221
      %p224 = scmp.ne.s32.totalorder %s207, %s223
      %p225 = scmp.eq.s32.totalorder %s31, 0
      %p226 = por %p224, %p225
      %s227 = ssub.s32 %s33, %s40
      %p228 = scmp.eq.s32.totalorder %s227, 0
      %s230 = sadd.s32 %s229, 1
      %s231 = scalar_select %p228, %s229, %s230
      %p234 = pneg %p228
      %p235 = scmp.eq.s32.totalorder %s25, 15
      %p236 = por %p234, %p235
      %p237 = scmp.ne.s32.totalorder %s229, %s232
      %p238 = scmp.eq.s32.totalorder %s25, 0
      %p239 = por %p237, %p238
      %p240 = scmp.ne.s32.totalorder %s229, %s232
      %p241 = scmp.eq.s32.totalorder %s30, 15
      %p242 = por %p240, %p241
      %p243 = scmp.ne.s32.totalorder %s232, %s233
      %p244 = scmp.eq.s32.totalorder %s30, 0
      %p245 = por %p243, %p244
      %p246 = scmp.ne.s32.totalorder %s232, %s233
      %p247 = scmp.eq.s32.totalorder %s31, 15
      %p248 = por %p246, %p247
      %p250 = scmp.ne.s32.totalorder %s233, %s249
      %p251 = scmp.eq.s32.totalorder %s31, 0
      %p252 = por %p250, %p251
      %s253 = ssub.s32 %s33, %s40
      %p254 = scmp.eq.s32.totalorder %s253, 0
      %s256 = sadd.s32 %s255, 1
      %s257 = scalar_select %p254, %s255, %s256
      %p260 = pneg %p254
      %p261 = scmp.eq.s32.totalorder %s25, 15
      %p262 = por %p260, %p261
      %p263 = scmp.ne.s32.totalorder %s255, %s258
      %p264 = scmp.eq.s32.totalorder %s25, 0
      %p265 = por %p263, %p264
      %p266 = scmp.ne.s32.totalorder %s255, %s258
      %p267 = scmp.eq.s32.totalorder %s30, 15
      %p268 = por %p266, %p267
      %p269 = scmp.ne.s32.totalorder %s258, %s259
      %p270 = scmp.eq.s32.totalorder %s30, 0
      %p271 = por %p269, %p270
      %p272 = scmp.ne.s32.totalorder %s258, %s259
      %p273 = scmp.eq.s32.totalorder %s31, 15
      %p274 = por %p272, %p273
      %p276 = scmp.ne.s32.totalorder %s259, %s275
      %p277 = scmp.eq.s32.totalorder %s31, 0
      %p278 = por %p276, %p277
      %s279 = ssub.s32 %s33, %s40
      %p280 = scmp.eq.s32.totalorder %s279, 0
      %s282 = sadd.s32 %s281, 1
      %s283 = scalar_select %p280, %s281, %s282
      %p286 = pneg %p280
      %p287 = scmp.eq.s32.totalorder %s25, 15
      %p288 = por %p286, %p287
      %p289 = scmp.ne.s32.totalorder %s281, %s284
      %p290 = scmp.eq.s32.totalorder %s25, 0
      %p291 = por %p289, %p290
      %p292 = scmp.ne.s32.totalorder %s281, %s284
      %p293 = scmp.eq.s32.totalorder %s30, 15
      %p294 = por %p292, %p293
      %p295 = scmp.ne.s32.totalorder %s284, %s285
      %p296 = scmp.eq.s32.totalorder %s30, 0
      %p297 = por %p295, %p296
      %p298 = scmp.ne.s32.totalorder %s284, %s285
      %p299 = scmp.eq.s32.totalorder %s31, 15
      %p300 = por %p298, %p299
      %p302 = scmp.ne.s32.totalorder %s285, %s301
      %p303 = scmp.eq.s32.totalorder %s31, 0
      %p304 = por %p302, %p303
      %s305 = ssub.s32 %s33, %s40
      %p306 = scmp.eq.s32.totalorder %s305, 0
      %s308 = sadd.s32 %s307, 1
      %s309 = scalar_select %p306, %s307, %s308
      %p312 = pneg %p306
      %p313 = scmp.eq.s32.totalorder %s25, 15
      %p314 = por %p312, %p313
      %p315 = scmp.ne.s32.totalorder %s307, %s310
      %p316 = scmp.eq.s32.totalorder %s25, 0
      %p317 = por %p315, %p316
      %p318 = scmp.ne.s32.totalorder %s307, %s310
      %p319 = scmp.eq.s32.totalorder %s30, 15
      %p320 = por %p318, %p319
      %p321 = scmp.ne.s32.totalorder %s310, %s311
      %p322 = scmp.eq.s32.totalorder %s30, 0
      %p323 = por %p321, %p322
      %p324 = scmp.ne.s32.totalorder %s310, %s311
      %p325 = scmp.eq.s32.totalorder %s31, 15
      %p326 = por %p324, %p325
      %p328 = scmp.ne.s32.totalorder %s311, %s327
      %p329 = scmp.eq.s32.totalorder %s31, 0
      %p330 = por %p328, %p329
      %s331 = ssub.s32 %s33, %s40
      %p332 = scmp.eq.s32.totalorder %s331, 0
      %s334 = sadd.s32 %s333, 1
      %s335 = scalar_select %p332, %s333, %s334
      %p338 = pneg %p332
      %p339 = scmp.eq.s32.totalorder %s25, 15
      %p340 = por %p338, %p339
      %p341 = scmp.ne.s32.totalorder %s333, %s336
      %p342 = scmp.eq.s32.totalorder %s25, 0
      %p343 = por %p341, %p342
      %p344 = scmp.ne.s32.totalorder %s333, %s336
      %p345 = scmp.eq.s32.totalorder %s30, 15
      %p346 = por %p344, %p345
      %p347 = scmp.ne.s32.totalorder %s336, %s337
      %p348 = scmp.eq.s32.totalorder %s30, 0
      %p349 = por %p347, %p348
      %p350 = scmp.ne.s32.totalorder %s336, %s337
      %p351 = scmp.eq.s32.totalorder %s31, 15
      %p352 = por %p350, %p351
      %p354 = scmp.ne.s32.totalorder %s337, %s353
      %p355 = scmp.eq.s32.totalorder %s31, 0
      %p356 = por %p354, %p355
      %s358 = sadd.s32 %s357, 1
      %p361 = scmp.eq.s32.totalorder %s25, 15
      %p362 = scmp.ne.s32.totalorder %s357, %s359
      %p363 = scmp.eq.s32.totalorder %s25, 0
      %p364 = por %p362, %p363
      %p365 = scmp.ne.s32.totalorder %s357, %s359
      %p366 = scmp.eq.s32.totalorder %s30, 15
      %p367 = por %p365, %p366
      %p368 = scmp.ne.s32.totalorder %s359, %s360
      %p369 = scmp.eq.s32.totalorder %s30, 0
      %p370 = por %p368, %p369
      %p371 = scmp.ne.s32.totalorder %s359, %s360
      %p372 = scmp.eq.s32.totalorder %s31, 15
      %p373 = por %p371, %p372
      %p375 = scmp.ne.s32.totalorder %s360, %s374
      %p376 = scmp.eq.s32.totalorder %s31, 0
      %p377 = por %p375, %p376
      %s379 = sadd.s32 %s378, 1
      %p382 = scmp.eq.s32.totalorder %s25, 15
      %p383 = scmp.ne.s32.totalorder %s378, %s380
      %p384 = scmp.eq.s32.totalorder %s25, 0
      %p385 = por %p383, %p384
      %p386 = scmp.ne.s32.totalorder %s378, %s380
      %p387 = scmp.eq.s32.totalorder %s30, 15
      %p388 = por %p386, %p387
      %p389 = scmp.ne.s32.totalorder %s380, %s381
      %p390 = scmp.eq.s32.totalorder %s30, 0
      %p391 = por %p389, %p390
      %p392 = scmp.ne.s32.totalorder %s380, %s381
      %p393 = scmp.eq.s32.totalorder %s31, 15
      %p394 = por %p392, %p393
      %p396 = scmp.ne.s32.totalorder %s381, %s395
      %p397 = scmp.eq.s32.totalorder %s31, 0
      %p398 = por %p396, %p397
      %s400 = sadd.s32 %s399, 1
      %p403 = scmp.eq.s32.totalorder %s25, 15
      %p404 = scmp.ne.s32.totalorder %s399, %s401
      %p405 = scmp.eq.s32.totalorder %s25, 0
      %p406 = por %p404, %p405
      %p407 = scmp.ne.s32.totalorder %s399, %s401
      %p408 = scmp.eq.s32.totalorder %s30, 15
      %p409 = por %p407, %p408
      %p410 = scmp.ne.s32.totalorder %s401, %s402
      %p411 = scmp.eq.s32.totalorder %s30, 0
      %p412 = por %p410, %p411
      %p413 = scmp.ne.s32.totalorder %s401, %s402
      %p414 = scmp.eq.s32.totalorder %s31, 15
      %p415 = por %p413, %p414
      %p417 = scmp.ne.s32.totalorder %s402, %s416
      %p418 = scmp.eq.s32.totalorder %s31, 0
      %p419 = por %p417, %p418
      %s421 = sadd.s32 %s420, 1
      %p424 = scmp.eq.s32.totalorder %s25, 15
      %p425 = scmp.ne.s32.totalorder %s420, %s422
      %p426 = scmp.eq.s32.totalorder %s25, 0
      %p427 = por %p425, %p426
      %p428 = scmp.ne.s32.totalorder %s420, %s422
      %p429 = scmp.eq.s32.totalorder %s30, 15
      %p430 = por %p428, %p429
      %p431 = scmp.ne.s32.totalorder %s422, %s423
      %p432 = scmp.eq.s32.totalorder %s30, 0
      %p433 = por %p431, %p432
      %p434 = scmp.ne.s32.totalorder %s422, %s423
      %p435 = scmp.eq.s32.totalorder %s31, 15
      %p436 = por %p434, %p435
      %p438 = scmp.ne.s32.totalorder %s423, %s437
      %p439 = scmp.eq.s32.totalorder %s31, 0
      %p440 = por %p438, %p439
      %s441 = ssub.s32 %s32, %s44
      %p442 = scmp.eq.s32.totalorder %s441, 0
      %s444 = sadd.s32 %s443, 1
      %s445 = scalar_select %p442, %s443, %s444
      %p448 = pneg %p442
      %p449 = scmp.eq.s32.totalorder %s25, 15
      %p450 = por %p448, %p449
      %p451 = scmp.ne.s32.totalorder %s443, %s446
      %p452 = scmp.eq.s32.totalorder %s25, 0
      %p453 = por %p451, %p452
      %p454 = scmp.ne.s32.totalorder %s443, %s446
      %p455 = scmp.eq.s32.totalorder %s30, 15
      %p456 = por %p454, %p455
      %p457 = scmp.ne.s32.totalorder %s446, %s447
      %p458 = scmp.eq.s32.totalorder %s30, 0
      %p459 = por %p457, %p458
      %p460 = scmp.ne.s32.totalorder %s446, %s447
      %p461 = scmp.eq.s32.totalorder %s31, 15
      %p462 = por %p460, %p461
      %p464 = scmp.ne.s32.totalorder %s447, %s463
      %p465 = scmp.eq.s32.totalorder %s31, 0
      %p466 = por %p464, %p465
      %p467 = scmp.le.s32.totalorder 1, %s25
      %p468 = scmp.lt.s32.totalorder %s25, 17
      %p469 = pnand %p467, %p468
      %p470 = pneg %p469
      // Predicated region
      $region9: #{tpu_custom_call.1} parent=5 // pred_check
        _
      $region10: #{tpu_custom_call.1} parent=5 // pred_check_branch
        %472 = sbr.rel (%p469) target = $region12
      $region11: #{tpu_custom_call.1} parent=5 // pred_region
        %s473 = ssub.s32 %s25, 1
        // Predicated region
        $region13: #{tpu_custom_call.1} parent=11 // pred_check
          %p474 = pneg %p370
        $region14: #{tpu_custom_call.1} parent=11 // pred_check_branch
          %476 = sbr.rel (%p474) target = $region16
        $region15: #{tpu_custom_call.1} parent=11 // pred_region
          _
        $region16: #{tpu_custom_call.1} parent=11 // pred_fallthru
          _
        // Predicated region
        $region17: #{tpu_custom_call.1} parent=11 // pred_check
          %p477 = pneg %p391
        $region18: #{tpu_custom_call.1} parent=11 // pred_check_branch
          %479 = sbr.rel (%p477) target = $region20
        $region19: #{tpu_custom_call.1} parent=11 // pred_region
          _
        $region20: #{tpu_custom_call.1} parent=11 // pred_fallthru
          _
        // Predicated region
        $region21: #{tpu_custom_call.1} parent=11 // pred_check
          %p480 = pneg %p412
        $region22: #{tpu_custom_call.1} parent=11 // pred_check_branch
          %482 = sbr.rel (%p480) target = $region24
        $region23: #{tpu_custom_call.1} parent=11 // pred_region
          _
        $region24: #{tpu_custom_call.1} parent=11 // pred_fallthru
          _
        // Predicated region
        $region25: #{tpu_custom_call.1} parent=11 // pred_check
          %p483 = pneg %p433
        $region26: #{tpu_custom_call.1} parent=11 // pred_check_branch
          %485 = sbr.rel (%p483) target = $region28
        $region27: #{tpu_custom_call.1} parent=11 // pred_region
          _
        $region28: #{tpu_custom_call.1} parent=11 // pred_fallthru
          _
      $region12: #{tpu_custom_call.1} parent=5 // pred_fallthru
        _
      %p486 = scmp.lt.s32.totalorder %s25, 16
      // Predicated region
      $region29: #{tpu_custom_call.1} parent=5 // pred_check
        %p487 = pneg %p486
      $region30: #{tpu_custom_call.1} parent=5 // pred_check_branch
        %489 = sbr.rel (%p487) target = $region32
      $region31: #{tpu_custom_call.1} parent=5 // pred_region
        // Predicated region
        $region33: #{tpu_custom_call.1} parent=31 // pred_check
          %p490 = pneg %p57
        $region34: #{tpu_custom_call.1} parent=31 // pred_check_branch
          %492 = sbr.rel (%p490) target = $region36
        $region35: #{tpu_custom_call.1} parent=31 // pred_region
          %p493 = scmp.lt.s32.totalorder %s32, 1
          %s494 = scalar_select %p493, %s32, 1
          %s495 = smul.addr %s494, 8
          %s496 = scalar_lea.vmem %s0, %s495
        $region36: #{tpu_custom_call.1} parent=31 // pred_fallthru
          _
        // Predicated region
        $region37: #{tpu_custom_call.1} parent=31 // pred_check
          %p497 = pneg %p83
        $region38: #{tpu_custom_call.1} parent=31 // pred_check_branch
          %499 = sbr.rel (%p497) target = $region40
        $region39: #{tpu_custom_call.1} parent=31 // pred_region
          %p500 = scmp.lt.s32.totalorder %s33, 7
          %s501 = scalar_select %p500, %s33, 7
          %s502 = scalar_lea.vmem %s1, %s501
        $region40: #{tpu_custom_call.1} parent=31 // pred_fallthru
          _
        // Predicated region
        $region41: #{tpu_custom_call.1} parent=31 // pred_check
          %p503 = pneg %p109
        $region42: #{tpu_custom_call.1} parent=31 // pred_check_branch
          %505 = sbr.rel (%p503) target = $region44
        $region43: #{tpu_custom_call.1} parent=31 // pred_region
          %p506 = scmp.lt.s32.totalorder %s33, 7
          %s507 = scalar_select %p506, %s33, 7
          %s508 = scalar_lea.vmem %s2, %s507
        $region44: #{tpu_custom_call.1} parent=31 // pred_fallthru
          _
        // Predicated region
        $region45: #{tpu_custom_call.1} parent=31 // pred_check
          %p509 = pneg %p135
        $region46: #{tpu_custom_call.1} parent=31 // pred_check_branch
          %511 = sbr.rel (%p509) target = $region48
        $region47: #{tpu_custom_call.1} parent=31 // pred_region
          %p512 = scmp.lt.s32.totalorder %s33, 7
          %s513 = scalar_select %p512, %s33, 7
          %s514 = smul.addr %s513, 16
          %s515 = smul.addr %s514, 4
          %s516 = scalar_lea.vmem %s3, %s515
        $region48: #{tpu_custom_call.1} parent=31 // pred_fallthru
          _
        // Predicated region
        $region49: #{tpu_custom_call.1} parent=31 // pred_check
          %p517 = pneg %p161
        $region50: #{tpu_custom_call.1} parent=31 // pred_check_branch
          %519 = sbr.rel (%p517) target = $region52
        $region51: #{tpu_custom_call.1} parent=31 // pred_region
          %p520 = scmp.lt.s32.totalorder %s33, 7
          %s521 = scalar_select %p520, %s33, 7
          %s522 = smul.addr %s521, 8
          %s523 = smul.addr %s522, 4
          %s524 = scalar_lea.vmem %s4, %s523
        $region52: #{tpu_custom_call.1} parent=31 // pred_fallthru
          _
        // Predicated region
        $region53: #{tpu_custom_call.1} parent=31 // pred_check
          %p525 = pneg %p187
        $region54: #{tpu_custom_call.1} parent=31 // pred_check_branch
          %527 = sbr.rel (%p525) target = $region56
        $region55: #{tpu_custom_call.1} parent=31 // pred_region
          %p528 = scmp.lt.s32.totalorder %s33, 7
          %s529 = scalar_select %p528, %s33, 7
          %s530 = scalar_lea.vmem %s5, %s529
        $region56: #{tpu_custom_call.1} parent=31 // pred_fallthru
          _
        // Predicated region
        $region57: #{tpu_custom_call.1} parent=31 // pred_check
          %p531 = pneg %p213
        $region58: #{tpu_custom_call.1} parent=31 // pred_check_branch
          %533 = sbr.rel (%p531) target = $region60
        $region59: #{tpu_custom_call.1} parent=31 // pred_region
          %p534 = scmp.lt.s32.totalorder %s33, 7
          %s535 = scalar_select %p534, %s33, 7
          %s536 = scalar_lea.vmem %s6, %s535
        $region60: #{tpu_custom_call.1} parent=31 // pred_fallthru
          _
        // Predicated region
        $region61: #{tpu_custom_call.1} parent=31 // pred_check
          %p537 = pneg %p239
        $region62: #{tpu_custom_call.1} parent=31 // pred_check_branch
          %539 = sbr.rel (%p537) target = $region64
        $region63: #{tpu_custom_call.1} parent=31 // pred_region
          %p540 = scmp.lt.s32.totalorder %s33, 7
          %s541 = scalar_select %p540, %s33, 7
          %s542 = scalar_lea.vmem %s7, %s541
        $region64: #{tpu_custom_call.1} parent=31 // pred_fallthru
          _
        // Predicated region
        $region65: #{tpu_custom_call.1} parent=31 // pred_check
          %p543 = pneg %p265
        $region66: #{tpu_custom_call.1} parent=31 // pred_check_branch
          %545 = sbr.rel (%p543) target = $region68
        $region67: #{tpu_custom_call.1} parent=31 // pred_region
          %p546 = scmp.lt.s32.totalorder %s33, 7
          %s547 = scalar_select %p546, %s33, 7
          %s548 = smul.addr %s547, 16
          %s549 = smul.addr %s548, 4
          %s550 = scalar_lea.vmem %s8, %s549
        $region68: #{tpu_custom_call.1} parent=31 // pred_fallthru
          _
        // Predicated region
        $region69: #{tpu_custom_call.1} parent=31 // pred_check
          %p551 = pneg %p291
        $region70: #{tpu_custom_call.1} parent=31 // pred_check_branch
          %553 = sbr.rel (%p551) target = $region72
        $region71: #{tpu_custom_call.1} parent=31 // pred_region
          %p554 = scmp.lt.s32.totalorder %s33, 7
          %s555 = scalar_select %p554, %s33, 7
          %s556 = smul.addr %s555, 2
          %s557 = scalar_lea.vmem %s9, %s556
        $region72: #{tpu_custom_call.1} parent=31 // pred_fallthru
          _
        // Predicated region
        $region73: #{tpu_custom_call.1} parent=31 // pred_check
          %p558 = pneg %p317
        $region74: #{tpu_custom_call.1} parent=31 // pred_check_branch
          %560 = sbr.rel (%p558) target = $region76
        $region75: #{tpu_custom_call.1} parent=31 // pred_region
          %p561 = scmp.lt.s32.totalorder %s33, 7
          %s562 = scalar_select %p561, %s33, 7
          %s563 = smul.addr %s562, 32
          %s564 = smul.addr %s563, 4
          %s565 = scalar_lea.vmem %s10, %s564
        $region76: #{tpu_custom_call.1} parent=31 // pred_fallthru
          _
        // Predicated region
        $region77: #{tpu_custom_call.1} parent=31 // pred_check
          %p566 = pneg %p343
        $region78: #{tpu_custom_call.1} parent=31 // pred_check_branch
          %568 = sbr.rel (%p566) target = $region80
        $region79: #{tpu_custom_call.1} parent=31 // pred_region
          %p569 = scmp.lt.s32.totalorder %s33, 7
          %s570 = scalar_select %p569, %s33, 7
          %s571 = scalar_lea.vmem %s11, %s570
        $region80: #{tpu_custom_call.1} parent=31 // pred_fallthru
          _
      $region32: #{tpu_custom_call.1} parent=5 // pred_fallthru
        _
      %p572 = scmp.le.s32.totalorder 1, %s25
      %p573 = scmp.lt.s32.totalorder %s25, 17
      %p574 = pnand %p572, %p573
      %p575 = pneg %p574
      // Predicated region
      $region81: #{tpu_custom_call.1} parent=5 // pred_check
        _
      $region82: #{tpu_custom_call.1} parent=5 // pred_check_branch
        %577 = sbr.rel (%p574) target = $region84
      $region83: #{tpu_custom_call.1} parent=5 // pred_region
        %s578 = ssub.s32 %s25, 1
        %p579 = scmp.lt.s32.totalorder %s34, 1
        %s580 = scalar_select %p579, %s34, 1
        %s581 = smul.addr %s580, 8
        %s582 = scalar_lea.vmem %s0, %s581
        %p583 = pneg %p63
        %p584 = pneg %p60
        %p585 = scmp.lt.s32.totalorder %s35, 7
        %s586 = scalar_select %p585, %s35, 7
        %s587 = scalar_lea.vmem %s1, %s586
        %p588 = pneg %p89
        %p589 = pneg %p86
        %p590 = scmp.lt.s32.totalorder %s35, 7
        %s591 = scalar_select %p590, %s35, 7
        %s592 = scalar_lea.vmem %s2, %s591
        %p593 = pneg %p115
        %p594 = pneg %p112
        %p595 = scmp.lt.s32.totalorder %s35, 7
        %s596 = scalar_select %p595, %s35, 7
        %s597 = smul.addr %s596, 16
        %s598 = smul.addr %s597, 4
        %s599 = scalar_lea.vmem %s3, %s598
        %p600 = pneg %p141
        %p601 = pneg %p138
        %p602 = scmp.lt.s32.totalorder %s35, 7
        %s603 = scalar_select %p602, %s35, 7
        %s604 = smul.addr %s603, 8
        %s605 = smul.addr %s604, 4
        %s606 = scalar_lea.vmem %s4, %s605
        %p607 = pneg %p167
        %p608 = pneg %p164
        %p609 = scmp.lt.s32.totalorder %s35, 7
        %s610 = scalar_select %p609, %s35, 7
        %s611 = scalar_lea.vmem %s5, %s610
        %p612 = pneg %p193
        %p613 = pneg %p190
        %p614 = scmp.lt.s32.totalorder %s35, 7
        %s615 = scalar_select %p614, %s35, 7
        %s616 = scalar_lea.vmem %s6, %s615
        %p617 = pneg %p219
        %p618 = pneg %p216
        %p619 = scmp.lt.s32.totalorder %s35, 7
        %s620 = scalar_select %p619, %s35, 7
        %s621 = scalar_lea.vmem %s7, %s620
        %p622 = pneg %p245
        %p623 = pneg %p242
        %p624 = scmp.lt.s32.totalorder %s35, 7
        %s625 = scalar_select %p624, %s35, 7
        %s626 = smul.addr %s625, 16
        %s627 = smul.addr %s626, 4
        %s628 = scalar_lea.vmem %s8, %s627
        %p629 = pneg %p271
        %p630 = pneg %p268
        %p631 = scmp.lt.s32.totalorder %s35, 7
        %s632 = scalar_select %p631, %s35, 7
        %s633 = smul.addr %s632, 2
        %s634 = scalar_lea.vmem %s9, %s633
        %p635 = pneg %p297
        %p636 = pneg %p294
        %p637 = scmp.lt.s32.totalorder %s35, 7
        %s638 = scalar_select %p637, %s35, 7
        %s639 = smul.addr %s638, 32
        %s640 = smul.addr %s639, 4
        %s641 = scalar_lea.vmem %s10, %s640
        %p642 = pneg %p323
        %p643 = pneg %p320
        %p644 = scmp.lt.s32.totalorder %s35, 7
        %s645 = scalar_select %p644, %s35, 7
        %s646 = scalar_lea.vmem %s11, %s645
        %p647 = pneg %p349
        %p648 = pneg %p346
        %p649 = pneg %p370
        %p650 = pneg %p367
        %p651 = pneg %p391
        %p652 = pneg %p388
        %p653 = pneg %p412
        %p654 = pneg %p409
        %p655 = pneg %p433
        %p656 = pneg %p430
        %p657 = pneg %p459
        %p658 = pneg %p456
        %s659 = sand.u32 %s446, 1
        %s660 = scalar_lea.sflag [#allocation4], %s659
        %s661 = sand.u32 %s446, 1
        %s662 = smul.addr %s661, 24
        %s663 = scalar_lea.vmem [#allocation3], %s662
        %p664 = scmp.lt.s32.totalorder %s34, 1
        %s665 = scalar_select %p664, %s34, 1
        %s666 = smul.addr %s665, 8
        %s667 = scalar_lea.vmem %s0, %s666
        %p668 = scmp.lt.s32.totalorder %s35, 7
        %s669 = scalar_select %p668, %s35, 7
        %s670 = scalar_lea.vmem %s1, %s669
        %p671 = scmp.lt.s32.totalorder %s35, 7
        %s672 = scalar_select %p671, %s35, 7
        %s673 = scalar_lea.vmem %s2, %s672
        %p674 = scmp.lt.s32.totalorder %s35, 7
        %s675 = scalar_select %p674, %s35, 7
        %s676 = smul.addr %s675, 16
        %s677 = smul.addr %s676, 4
        %s678 = scalar_lea.vmem %s3, %s677
        %p679 = scmp.lt.s32.totalorder %s35, 7
        %s680 = scalar_select %p679, %s35, 7
        %s681 = smul.addr %s680, 8
        %s682 = smul.addr %s681, 4
        %s683 = scalar_lea.vmem %s4, %s682
        %p684 = scmp.lt.s32.totalorder %s35, 7
        %s685 = scalar_select %p684, %s35, 7
        %s686 = scalar_lea.vmem %s5, %s685
        %p687 = scmp.lt.s32.totalorder %s35, 7
        %s688 = scalar_select %p687, %s35, 7
        %s689 = scalar_lea.vmem %s6, %s688
        %p690 = scmp.lt.s32.totalorder %s35, 7
        %s691 = scalar_select %p690, %s35, 7
        %s692 = scalar_lea.vmem %s7, %s691
        %p693 = scmp.lt.s32.totalorder %s35, 7
        %s694 = scalar_select %p693, %s35, 7
        %s695 = smul.addr %s694, 16
        %s696 = smul.addr %s695, 4
        %s697 = scalar_lea.vmem %s8, %s696
        %p698 = scmp.lt.s32.totalorder %s35, 7
        %s699 = scalar_select %p698, %s35, 7
        %s700 = smul.addr %s699, 2
        %s701 = scalar_lea.vmem %s9, %s700
        %p702 = scmp.lt.s32.totalorder %s35, 7
        %s703 = scalar_select %p702, %s35, 7
        %s704 = smul.addr %s703, 32
        %s705 = smul.addr %s704, 4
        %s706 = scalar_lea.vmem %s10, %s705
        %p707 = scmp.lt.s32.totalorder %s35, 7
        %s708 = scalar_select %p707, %s35, 7
        %s709 = scalar_lea.vmem %s11, %s708
        %p711 = scmp.eq.s32.totalorder %s35, 0
        // Predicated region
        $region85: #{tpu_custom_call.1} parent=83 // pred_check
          %p712 = pneg %p711
        $region86: #{tpu_custom_call.1} parent=83 // pred_check_branch
          %714 = sbr.rel (%p712) target = $region88
        $region87: #{tpu_custom_call.1} parent=83 // pred_region
          %v715 = vld [vmem:[%s667] sm:$0xff]
          %vm716 = vcmask 523264
          %717 = vst.msk [vmem:[#allocation2] sm:$0xff] %vm716, %v715
        $region88: #{tpu_custom_call.1} parent=83 // pred_fallthru
          _
        %v718 = vld [vmem:[#allocation2] sm:$0xff]
        %v719 = vld [vmem:[%s670] sm:$0x1]
        %v720 = vld [vmem:[%s673] sm:$0x1]
        %vm721 = vcmask 523264
        %v722 = vsel %vm721, %v718, 0.0
        %723 = vadd.xlane.f32.xlu0 %v722
        %v724 = vpop.xlane.xlu0 %723
        %v725 = vrcp.pop 64.0
        %v726 = vmul.f32 64.0, %v725
        %v727 = vsub.f32 1.0, %v726
        %v728 = vmul.f32 %v725, %v727
        %v729 = vadd.f32 %v725, %v728
        %vm730 = vweird.f32 %v725
        %v731 = vsel %vm730, %v725, %v729
        %v732 = vmul.f32 %v724, %v731
        %v733 = vsub.f32 %v718, %v732
        %v734 = vmul.f32 %v733, %v733
        %v735 = vsel %vm721, %v734, 0.0
        %736 = vadd.xlane.f32.xlu0 %v735
        %v737 = vpop.xlane.xlu0 %736
        %v738 = vmul.f32 %v737, %v731
        %v739 = vadd.f32 %v738, 1e-05
        %v740 = vrsqrt.pop %v739
        %v741 = vmul.f32 %v740, %v739
        %v742 = vmul.f32 %v741, %v740
        %v743 = vmul.f32 0.5, %v742
        %v744 = vsub.f32 1.5, %v743
        %v745 = vmul.f32 %v740, %v744
        %vm746 = vweird.f32 %v739
        %vm747 = vweird.f32 %v740
        %vm748 = vmor %vm746, %vm747
        %v749 = vsel %vm748, %v740, %v745
        %v750 = vmul.f32 %v733, %v749
        %v752 = vperm.slane %v719, 0
        %v754 = vmul.f32 %v750, %v752
        %v756 = vperm.slane %v720, 0
        %v758 = vadd.f32 %v754, %v756
        %v759 = vld [vmem:[%s678] sm:$0xff]
        %v760 = vld [vmem:[%s678 + $0x8] sm:$0xff]
        %v761 = vld [vmem:[%s678 + $0x10] sm:$0xff]
        %v762 = vld [vmem:[%s678 + $0x18] sm:$0xff]
        %v763 = vld [vmem:[%s678 + $0x20] sm:$0xff]
        %v764 = vld [vmem:[%s678 + $0x28] sm:$0xff]
        %v765 = vld [vmem:[%s678 + $0x30] sm:$0xff]
        %v766 = vld [vmem:[%s678 + $0x38] sm:$0xff]
        %v767 = vpack.c.bf16 %v758, %v758
        %v776 = vunpack.c.l.b16 %v759
        %v777 = vunpack.c.h.b16 %v759
        %v778 = vunpack.c.l.b16 %v760
        %v779 = vunpack.c.h.b16 %v760
        %v780 = vunpack.c.l.b16 %v761
        %v781 = vunpack.c.h.b16 %v761
        %v782 = vunpack.c.l.b16 %v762
        %v783 = vunpack.c.h.b16 %v762
        %v784 = vunpack.c.l.b16 %v763
        %v785 = vunpack.c.h.b16 %v763
        %v786 = vunpack.c.l.b16 %v764
        %v787 = vunpack.c.h.b16 %v764
        %v788 = vunpack.c.l.b16 %v765
        %v789 = vunpack.c.h.b16 %v765
        %v790 = vunpack.c.l.b16 %v766
        %v791 = vunpack.c.h.b16 %v766
        %v792 = vpack.c.b16 %v778, %v776
        %v793 = vpack.c.b16 %v779, %v777
        %v794 = vpack.c.b16 %v782, %v780
        %v795 = vpack.c.b16 %v783, %v781
        %v796 = vpack.c.b16 %v786, %v784
        %v797 = vpack.c.b16 %v787, %v785
        %v798 = vpack.c.b16 %v790, %v788
        %v799 = vpack.c.b16 %v791, %v789
        %v809 = vsel %vm721, %v767, 0
        %811 = vmatpush.bf16.msra.mxu0 0
        %812 = vmatpush.bf16.msra.mxu0 0
        %813 = vmatpush.bf16.msra.mxu0 0
        %814 = vmatpush.bf16.msra.mxu0 0
        %815 = vmatpush.bf16.msra.mxu0 %v798
        %816 = vmatpush.bf16.msra.mxu0 %v796
        %817 = vmatpush.bf16.msra.mxu0 %v794
        %818 = vmatpush.bf16.msra.mxu0 %v792
        %819 = vmatmul.bf16.gmra.mxu0 %v809
        %v820 = vpop.f32.mrf.mxu0
        %v821 = vadd.f32 0.0, %v820
        %v822 = vpop.f32.mrf.mxu0
        %823 = vdwg.mxu0
        %824 = vmatpush.bf16.msra.mxu0 0
        %825 = vmatpush.bf16.msra.mxu0 0
        %826 = vmatpush.bf16.msra.mxu0 0
        %827 = vmatpush.bf16.msra.mxu0 0
        %828 = vmatpush.bf16.msra.mxu0 %v799
        %829 = vmatpush.bf16.msra.mxu0 %v797
        %830 = vmatpush.bf16.msra.mxu0 %v795
        %831 = vmatpush.bf16.msra.mxu0 %v793
        %832 = vmatmul.bf16.gmra.mxu0 %v809
        %v833 = vpop.f32.mrf.mxu0
        %v834 = vadd.f32 0.0, %v833
        %v835 = vpop.f32.mrf.mxu0
        %836 = vdwg.mxu0
        %v837 = vmul.f32 %v821, 0.125
        %v838 = vpack.c.bf16 %v837, %v837
        %v839 = vpack.c.bf16 %v821, %v821
        %v840 = vpack.c.bf16 %v834, %v834
        %v842 = vunpack.c.l.b16 %v839
        %v843 = vpack.c.b16 %v842, %v842
        %844 = vrot.lane.b32.xlu0 %v843, 64
        %v845 = vpop.permute.xlu0 %844
        %vm846 = vcmask 130048
        %v848 = vsel %vm846, %v838, 0
        %v851 = vsel %vm846, %v845, 0
        %853 = vmatpush.bf16.xpose.msra.mxu0 0
        %854 = vmatpush.bf16.xpose.msra.mxu0 0
        %855 = vmatpush.bf16.xpose.msra.mxu0 0
        %856 = vmatpush.bf16.xpose.msra.mxu0 0
        %857 = vmatpush.bf16.xpose.msra.mxu0 0
        %858 = vmatpush.bf16.xpose.msra.mxu0 0
        %859 = vmatpush.bf16.xpose.msra.mxu0 0
        %860 = vmatpush.bf16.xpose.msra.mxu0 %v851
        %861 = vmatmul.bf16.gmra.mxu0 %v848
        %v862 = vpop.f32.mrf.mxu0
        %v863 = vadd.f32 0.0, %v862
        %v864 = vpop.f32.mrf.mxu0
        %865 = vdwg.mxu0
        %vm866 = vcmask 64512
        %v867 = vsel %vm866, %v863, -inf
        %868 = vmax.xlane.f32.xlu0 %v867
        %v869 = vpop.xlane.xlu0 %868
        %v870 = vsub.f32 %v863, %v869
        %v871 = vmul.f32 %v870, 1.442695
        %v872 = vpow.pop %v871
        %v873 = vsel %vm866, %v872, 0.0
        %874 = vadd.xlane.f32.xlu0 %v873
        %v875 = vpop.xlane.xlu0 %874
        %v876 = vrcp.pop %v875
        %v877 = vmul.f32 %v872, %v876
        %v878 = vpack.c.bf16 %v877, %v877
        %v880 = vsel %vm866, %v878, 0
        %vm882 = vcmask 1043456
        %v884 = vsel %vm882, %v840, 0
        %886 = vmatpush.bf16.msra.mxu0 0
        %887 = vmatpush.bf16.msra.mxu0 0
        %888 = vmatpush.bf16.msra.mxu0 0
        %889 = vmatpush.bf16.msra.mxu0 0
        %890 = vmatpush.bf16.msra.mxu0 0
        %891 = vmatpush.bf16.msra.mxu0 0
        %892 = vmatpush.bf16.msra.mxu0 0
        %893 = vmatpush.bf16.msra.mxu0 %v884
        %894 = vmatmul.bf16.gmra.mxu0 %v880
        %v895 = vpop.f32.mrf.mxu0
        %v896 = vadd.f32 0.0, %v895
        %v897 = vpop.f32.mrf.mxu0
        %898 = vdwg.mxu0
        %v900 = vunpack.c.l.b16 %v838
        %v901 = vpack.c.b16 %v900, %v900
        %902 = vrot.lane.b32.xlu0 %v901, 112
        %v903 = vpop.permute.xlu0 %902
        %904 = vrot.lane.b32.xlu0 %v843, 48
        %v905 = vpop.permute.xlu0 %904
        %v907 = vsel %vm846, %v903, 0
        %v910 = vsel %vm846, %v905, 0
        %912 = vmatpush.bf16.xpose.msra.mxu0 0
        %913 = vmatpush.bf16.xpose.msra.mxu0 0
        %914 = vmatpush.bf16.xpose.msra.mxu0 0
        %915 = vmatpush.bf16.xpose.msra.mxu0 0
        %916 = vmatpush.bf16.xpose.msra.mxu0 0
        %917 = vmatpush.bf16.xpose.msra.mxu0 0
        %918 = vmatpush.bf16.xpose.msra.mxu0 0
        %919 = vmatpush.bf16.xpose.msra.mxu0 %v910
        %920 = vmatmul.bf16.gmra.mxu0 %v907
        %v921 = vpop.f32.mrf.mxu0
        %v922 = vadd.f32 0.0, %v921
        %v923 = vpop.f32.mrf.mxu0
        %924 = vdwg.mxu0
        %v925 = vsel %vm866, %v922, -inf
        %926 = vmax.xlane.f32.xlu0 %v925
        %v927 = vpop.xlane.xlu0 %926
        %v928 = vsub.f32 %v922, %v927
        %v929 = vmul.f32 %v928, 1.442695
        %v930 = vpow.pop %v929
        %v931 = vsel %vm866, %v930, 0.0
        %932 = vadd.xlane.f32.xlu0 %v931
        %v933 = vpop.xlane.xlu0 %932
        %v934 = vrcp.pop %v933
        %v935 = vmul.f32 %v930, %v934
        %v936 = vpack.c.bf16 %v935, %v935
        %v938 = vunpack.c.l.b16 %v840
        %v939 = vpack.c.b16 %v938, %v938
        %940 = vrot.lane.b32.xlu0 %v939, 112
        %v941 = vpop.permute.xlu0 %940
        %v943 = vsel %vm866, %v936, 0
        %v946 = vsel %vm882, %v941, 0
        %948 = vmatpush.bf16.msra.mxu0 0
        %949 = vmatpush.bf16.msra.mxu0 0
        %950 = vmatpush.bf16.msra.mxu0 0
        %951 = vmatpush.bf16.msra.mxu0 0
        %952 = vmatpush.bf16.msra.mxu0 0
        %953 = vmatpush.bf16.msra.mxu0 0
        %954 = vmatpush.bf16.msra.mxu0 0
        %955 = vmatpush.bf16.msra.mxu0 %v946
        %956 = vmatmul.bf16.gmra.mxu0 %v943
        %v957 = vpop.f32.mrf.mxu0
        %v958 = vadd.f32 0.0, %v957
        %v959 = vpop.f32.mrf.mxu0
        %960 = vdwg.mxu0
        %961 = vrot.lane.b32.xlu0 %v901, 96
        %v962 = vpop.permute.xlu0 %961
        %963 = vrot.lane.b32.xlu0 %v843, 32
        %v964 = vpop.permute.xlu0 %963
        %v966 = vsel %vm846, %v962, 0
        %v969 = vsel %vm846, %v964, 0
        %971 = vmatpush.bf16.xpose.msra.mxu0 0
        %972 = vmatpush.bf16.xpose.msra.mxu0 0
        %973 = vmatpush.bf16.xpose.msra.mxu0 0
        %974 = vmatpush.bf16.xpose.msra.mxu0 0
        %975 = vmatpush.bf16.xpose.msra.mxu0 0
        %976 = vmatpush.bf16.xpose.msra.mxu0 0
        %977 = vmatpush.bf16.xpose.msra.mxu0 0
        %978 = vmatpush.bf16.xpose.msra.mxu0 %v969
        %979 = vmatmul.bf16.gmra.mxu0 %v966
        %v980 = vpop.f32.mrf.mxu0
        %v981 = vadd.f32 0.0, %v980
        %v982 = vpop.f32.mrf.mxu0
        %983 = vdwg.mxu0
        %v984 = vsel %vm866, %v981, -inf
        %985 = vmax.xlane.f32.xlu0 %v984
        %v986 = vpop.xlane.xlu0 %985
        %v987 = vsub.f32 %v981, %v986
        %v988 = vmul.f32 %v987, 1.442695
        %v989 = vpow.pop %v988
        %v990 = vsel %vm866, %v989, 0.0
        %991 = vadd.xlane.f32.xlu0 %v990
        %v992 = vpop.xlane.xlu0 %991
        %v993 = vrcp.pop %v992
        %v994 = vmul.f32 %v989, %v993
        %v995 = vpack.c.bf16 %v994, %v994
        %996 = vrot.lane.b32.xlu0 %v939, 96
        %v997 = vpop.permute.xlu0 %996
        %v999 = vsel %vm866, %v995, 0
        %v1002 = vsel %vm882, %v997, 0
        %1004 = vmatpush.bf16.msra.mxu0 0
        %1005 = vmatpush.bf16.msra.mxu0 0
        %1006 = vmatpush.bf16.msra.mxu0 0
        %1007 = vmatpush.bf16.msra.mxu0 0
        %1008 = vmatpush.bf16.msra.mxu0 0
        %1009 = vmatpush.bf16.msra.mxu0 0
        %1010 = vmatpush.bf16.msra.mxu0 0
        %1011 = vmatpush.bf16.msra.mxu0 %v1002
        %1012 = vmatmul.bf16.gmra.mxu0 %v999
        %v1013 = vpop.f32.mrf.mxu0
        %v1014 = vadd.f32 0.0, %v1013
        %v1015 = vpop.f32.mrf.mxu0
        %1016 = vdwg.mxu0
        %1017 = vrot.lane.b32.xlu0 %v901, 80
        %v1018 = vpop.permute.xlu0 %1017
        %1019 = vrot.lane.b32.xlu0 %v843, 16
        %v1020 = vpop.permute.xlu0 %1019
        %v1022 = vsel %vm846, %v1018, 0
        %v1025 = vsel %vm846, %v1020, 0
        %1027 = vmatpush.bf16.xpose.msra.mxu0 0
        %1028 = vmatpush.bf16.xpose.msra.mxu0 0
        %1029 = vmatpush.bf16.xpose.msra.mxu0 0
        %1030 = vmatpush.bf16.xpose.msra.mxu0 0
        %1031 = vmatpush.bf16.xpose.msra.mxu0 0
        %1032 = vmatpush.bf16.xpose.msra.mxu0 0
        %1033 = vmatpush.bf16.xpose.msra.mxu0 0
        %1034 = vmatpush.bf16.xpose.msra.mxu0 %v1025
        %1035 = vmatmul.bf16.gmra.mxu0 %v1022
        %v1036 = vpop.f32.mrf.mxu0
        %v1037 = vadd.f32 0.0, %v1036
        %v1038 = vpop.f32.mrf.mxu0
        %1039 = vdwg.mxu0
        %v1040 = vsel %vm866, %v1037, -inf
        %1041 = vmax.xlane.f32.xlu0 %v1040
        %v1042 = vpop.xlane.xlu0 %1041
        %v1043 = vsub.f32 %v1037, %v1042
        %v1044 = vmul.f32 %v1043, 1.442695
        %v1045 = vpow.pop %v1044
        %v1046 = vsel %vm866, %v1045, 0.0
        %1047 = vadd.xlane.f32.xlu0 %v1046
        %v1048 = vpop.xlane.xlu0 %1047
        %v1049 = vrcp.pop %v1048
        %v1050 = vmul.f32 %v1045, %v1049
        %v1051 = vpack.c.bf16 %v1050, %v1050
        %1052 = vrot.lane.b32.xlu0 %v939, 80
        %v1053 = vpop.permute.xlu0 %1052
        %v1055 = vsel %vm866, %v1051, 0
        %v1058 = vsel %vm882, %v1053, 0
        %1060 = vmatpush.bf16.msra.mxu0 0
        %1061 = vmatpush.bf16.msra.mxu0 0
        %1062 = vmatpush.bf16.msra.mxu0 0
        %1063 = vmatpush.bf16.msra.mxu0 0
        %1064 = vmatpush.bf16.msra.mxu0 0
        %1065 = vmatpush.bf16.msra.mxu0 0
        %1066 = vmatpush.bf16.msra.mxu0 0
        %1067 = vmatpush.bf16.msra.mxu0 %v1058
        %1068 = vmatmul.bf16.gmra.mxu0 %v1055
        %v1069 = vpop.f32.mrf.mxu0
        %v1070 = vadd.f32 0.0, %v1069
        %v1071 = vpop.f32.mrf.mxu0
        %1072 = vdwg.mxu0
        %1074 = vrot.lane.b32.xlu0 %v958, 16
        %v1075 = vpop.permute.xlu0 %1074
        %1078 = vrot.lane.b32.xlu0 %v1014, 32
        %v1079 = vpop.permute.xlu0 %1078
        %1082 = vrot.lane.b32.xlu0 %v1070, 48
        %v1083 = vpop.permute.xlu0 %1082
        %v1085 = vsel %vm846, %v896, %v1075
        %vm1086 = vcmask 261120
        %v1087 = vsel %vm1086, %v1085, %v1079
        %vm1088 = vcmask 392192
        %v1089 = vsel %vm1088, %v1087, %v1083
        %v1090 = vld [vmem:[%s683] sm:$0xf]
        %v1091 = vld [vmem:[%s683 + $0x4] sm:$0xf]
        %v1092 = vld [vmem:[%s683 + $0x8] sm:$0xf]
        %v1093 = vld [vmem:[%s683 + $0xc] sm:$0xf]
        %v1094 = vld [vmem:[%s683 + $0x10] sm:$0xf]
        %v1095 = vld [vmem:[%s683 + $0x14] sm:$0xf]
        %v1096 = vld [vmem:[%s683 + $0x18] sm:$0xf]
        %v1097 = vld [vmem:[%s683 + $0x1c] sm:$0xf]
        %v1098 = vpack.c.bf16 %v1089, %v1089
        %v1107 = vunpack.c.l.b16 %v1090
        %v1108 = vunpack.c.l.b16 %v1091
        %v1109 = vunpack.c.l.b16 %v1092
        %v1110 = vunpack.c.l.b16 %v1093
        %v1111 = vunpack.c.l.b16 %v1094
        %v1112 = vunpack.c.l.b16 %v1095
        %v1113 = vunpack.c.l.b16 %v1096
        %v1114 = vunpack.c.l.b16 %v1097
        %v1115 = vpack.c.b16 %v1108, %v1107
        %v1116 = vpack.c.b16 %v1110, %v1109
        %v1117 = vpack.c.b16 %v1112, %v1111
        %v1118 = vpack.c.b16 %v1114, %v1113
        %v1124 = vsel %vm721, %v1098, 0
        %1126 = vmatpush.bf16.msra.mxu0 0
        %1127 = vmatpush.bf16.msra.mxu0 0
        %1128 = vmatpush.bf16.msra.mxu0 0
        %1129 = vmatpush.bf16.msra.mxu0 0
        %1130 = vmatpush.bf16.msra.mxu0 %v1118
        %1131 = vmatpush.bf16.msra.mxu0 %v1117
        %1132 = vmatpush.bf16.msra.mxu0 %v1116
        %1133 = vmatpush.bf16.msra.mxu0 %v1115
        %1134 = vmatmul.bf16.gmra.mxu0 %v1124
        %v1135 = vpop.f32.mrf.mxu0
        %v1136 = vadd.f32 0.0, %v1135
        %v1137 = vpop.f32.mrf.mxu0
        %1138 = vdwg.mxu0
        %v1139 = vadd.f32 %v718, %v1136
        %v1140 = vld [vmem:[%s686] sm:$0x1]
        %v1142 = vperm.slane %v1140, 0
        %v1144 = vadd.f32 %v1139, %v1142
        %v1145 = vld [vmem:[%s689] sm:$0x1]
        %v1146 = vld [vmem:[%s692] sm:$0x1]
        %v1147 = vsel %vm721, %v1144, 0.0
        %1148 = vadd.xlane.f32.xlu0 %v1147
        %v1149 = vpop.xlane.xlu0 %1148
        %v1150 = vmul.f32 %v1149, %v731
        %v1151 = vsub.f32 %v1144, %v1150
        %v1152 = vmul.f32 %v1151, %v1151
        %v1153 = vsel %vm721, %v1152, 0.0
        %1154 = vadd.xlane.f32.xlu0 %v1153
        %v1155 = vpop.xlane.xlu0 %1154
        %v1156 = vmul.f32 %v1155, %v731
        %v1157 = vadd.f32 %v1156, 1e-05
        %v1158 = vrsqrt.pop %v1157
        %v1159 = vmul.f32 %v1158, %v1157
        %v1160 = vmul.f32 %v1159, %v1158
        %v1161 = vmul.f32 0.5, %v1160
        %v1162 = vsub.f32 1.5, %v1161
        %v1163 = vmul.f32 %v1158, %v1162
        %vm1164 = vweird.f32 %v1157
        %vm1165 = vweird.f32 %v1158
        %vm1166 = vmor %vm1164, %vm1165
        %v1167 = vsel %vm1166, %v1158, %v1163
        %v1168 = vmul.f32 %v1151, %v1167
        %v1170 = vperm.slane %v1145, 0
        %v1172 = vmul.f32 %v1168, %v1170
        %v1174 = vperm.slane %v1146, 0
        %v1176 = vadd.f32 %v1172, %v1174
        %v1177 = vld [vmem:[%s697] sm:$0xff]
        %v1178 = vld [vmem:[%s697 + $0x8] sm:$0xff]
        %v1179 = vld [vmem:[%s697 + $0x10] sm:$0xff]
        %v1180 = vld [vmem:[%s697 + $0x18] sm:$0xff]
        %v1181 = vld [vmem:[%s697 + $0x20] sm:$0xff]
        %v1182 = vld [vmem:[%s697 + $0x28] sm:$0xff]
        %v1183 = vld [vmem:[%s697 + $0x30] sm:$0xff]
        %v1184 = vld [vmem:[%s697 + $0x38] sm:$0xff]
        %v1185 = vpack.c.bf16 %v1176, %v1176
        %v1186 = vld [vmem:[%s701] sm:$0x3]
        %v1188 = vperm.slane %v1186, 0
        %v1189 = vperm.slane %v1186, 1
        %v1200 = vunpack.c.l.b16 %v1177
        %v1201 = vunpack.c.h.b16 %v1177
        %v1202 = vunpack.c.l.b16 %v1178
        %v1203 = vunpack.c.h.b16 %v1178
        %v1204 = vunpack.c.l.b16 %v1179
        %v1205 = vunpack.c.h.b16 %v1179
        %v1206 = vunpack.c.l.b16 %v1180
        %v1207 = vunpack.c.h.b16 %v1180
        %v1208 = vunpack.c.l.b16 %v1181
        %v1209 = vunpack.c.h.b16 %v1181
        %v1210 = vunpack.c.l.b16 %v1182
        %v1211 = vunpack.c.h.b16 %v1182
        %v1212 = vunpack.c.l.b16 %v1183
        %v1213 = vunpack.c.h.b16 %v1183
        %v1214 = vunpack.c.l.b16 %v1184
        %v1215 = vunpack.c.h.b16 %v1184
        %v1216 = vpack.c.b16 %v1202, %v1200
        %v1217 = vpack.c.b16 %v1203, %v1201
        %v1218 = vpack.c.b16 %v1206, %v1204
        %v1219 = vpack.c.b16 %v1207, %v1205
        %v1220 = vpack.c.b16 %v1210, %v1208
        %v1221 = vpack.c.b16 %v1211, %v1209
        %v1222 = vpack.c.b16 %v1214, %v1212
        %v1223 = vpack.c.b16 %v1215, %v1213
        %v1233 = vsel %vm721, %v1185, 0
        %1235 = vmatpush.bf16.msra.mxu0 0
        %1236 = vmatpush.bf16.msra.mxu0 0
        %1237 = vmatpush.bf16.msra.mxu0 0
        %1238 = vmatpush.bf16.msra.mxu0 0
        %1239 = vmatpush.bf16.msra.mxu0 %v1222
        %1240 = vmatpush.bf16.msra.mxu0 %v1220
        %1241 = vmatpush.bf16.msra.mxu0 %v1218
        %1242 = vmatpush.bf16.msra.mxu0 %v1216
        %1243 = vmatmul.bf16.gmra.mxu0 %v1233
        %v1244 = vpop.f32.mrf.mxu0
        %v1245 = vadd.f32 %v1188, %v1244
        %v1246 = vpop.f32.mrf.mxu0
        %1247 = vdwg.mxu0
        %1248 = vmatpush.bf16.msra.mxu0 0
        %1249 = vmatpush.bf16.msra.mxu0 0
        %1250 = vmatpush.bf16.msra.mxu0 0
        %1251 = vmatpush.bf16.msra.mxu0 0
        %1252 = vmatpush.bf16.msra.mxu0 %v1223
        %1253 = vmatpush.bf16.msra.mxu0 %v1221
        %1254 = vmatpush.bf16.msra.mxu0 %v1219
        %1255 = vmatpush.bf16.msra.mxu0 %v1217
        %1256 = vmatmul.bf16.gmra.mxu0 %v1233
        %v1257 = vpop.f32.mrf.mxu0
        %v1258 = vadd.f32 %v1189, %v1257
        %v1259 = vpop.f32.mrf.mxu0
        %1260 = vdwg.mxu0
        %v1261 = vmax.f32 %v1245, 0.0
        %v1262 = vmax.f32 %v1258, 0.0
        %v1263 = vld [vmem:[%s706] sm:$0xf]
        %v1264 = vld [vmem:[%s706 + $0x4] sm:$0xf]
        %v1265 = vld [vmem:[%s706 + $0x8] sm:$0xf]
        %v1266 = vld [vmem:[%s706 + $0xc] sm:$0xf]
        %v1267 = vld [vmem:[%s706 + $0x10] sm:$0xf]
        %v1268 = vld [vmem:[%s706 + $0x14] sm:$0xf]
        %v1269 = vld [vmem:[%s706 + $0x18] sm:$0xf]
        %v1270 = vld [vmem:[%s706 + $0x1c] sm:$0xf]
        %v1271 = vld [vmem:[%s706 + $0x20] sm:$0xf]
        %v1272 = vld [vmem:[%s706 + $0x24] sm:$0xf]
        %v1273 = vld [vmem:[%s706 + $0x28] sm:$0xf]
        %v1274 = vld [vmem:[%s706 + $0x2c] sm:$0xf]
        %v1275 = vld [vmem:[%s706 + $0x30] sm:$0xf]
        %v1276 = vld [vmem:[%s706 + $0x34] sm:$0xf]
        %v1277 = vld [vmem:[%s706 + $0x38] sm:$0xf]
        %v1278 = vld [vmem:[%s706 + $0x3c] sm:$0xf]
        %v1279 = vld [vmem:[%s706 + $0x40] sm:$0xf]
        %v1280 = vld [vmem:[%s706 + $0x44] sm:$0xf]
        %v1281 = vld [vmem:[%s706 + $0x48] sm:$0xf]
        %v1282 = vld [vmem:[%s706 + $0x4c] sm:$0xf]
        %v1283 = vld [vmem:[%s706 + $0x50] sm:$0xf]
        %v1284 = vld [vmem:[%s706 + $0x54] sm:$0xf]
        %v1285 = vld [vmem:[%s706 + $0x58] sm:$0xf]
        %v1286 = vld [vmem:[%s706 + $0x5c] sm:$0xf]
        %v1287 = vld [vmem:[%s706 + $0x60] sm:$0xf]
        %v1288 = vld [vmem:[%s706 + $0x64] sm:$0xf]
        %v1289 = vld [vmem:[%s706 + $0x68] sm:$0xf]
        %v1290 = vld [vmem:[%s706 + $0x6c] sm:$0xf]
        %v1291 = vld [vmem:[%s706 + $0x70] sm:$0xf]
        %v1292 = vld [vmem:[%s706 + $0x74] sm:$0xf]
        %v1293 = vld [vmem:[%s706 + $0x78] sm:$0xf]
        %v1294 = vld [vmem:[%s706 + $0x7c] sm:$0xf]
        %v1295 = vpack.c.bf16 %v1261, %v1261
        %v1296 = vpack.c.bf16 %v1262, %v1262
        %v1297 = vld [vmem:[%s709] sm:$0x1]
        %v1299 = vperm.slane %v1297, 0
        %v1333 = vunpack.c.l.b16 %v1263
        %v1334 = vunpack.c.l.b16 %v1264
        %v1335 = vunpack.c.l.b16 %v1265
        %v1336 = vunpack.c.l.b16 %v1266
        %v1337 = vunpack.c.l.b16 %v1267
        %v1338 = vunpack.c.l.b16 %v1268
        %v1339 = vunpack.c.l.b16 %v1269
        %v1340 = vunpack.c.l.b16 %v1270
        %v1341 = vunpack.c.l.b16 %v1271
        %v1342 = vunpack.c.l.b16 %v1272
        %v1343 = vunpack.c.l.b16 %v1273
        %v1344 = vunpack.c.l.b16 %v1274
        %v1345 = vunpack.c.l.b16 %v1275
        %v1346 = vunpack.c.l.b16 %v1276
        %v1347 = vunpack.c.l.b16 %v1277
        %v1348 = vunpack.c.l.b16 %v1278
        %v1349 = vunpack.c.l.b16 %v1279
        %v1350 = vunpack.c.l.b16 %v1280
        %v1351 = vunpack.c.l.b16 %v1281
        %v1352 = vunpack.c.l.b16 %v1282
        %v1353 = vunpack.c.l.b16 %v1283
        %v1354 = vunpack.c.l.b16 %v1284
        %v1355 = vunpack.c.l.b16 %v1285
        %v1356 = vunpack.c.l.b16 %v1286
        %v1357 = vunpack.c.l.b16 %v1287
        %v1358 = vunpack.c.l.b16 %v1288
        %v1359 = vunpack.c.l.b16 %v1289
        %v1360 = vunpack.c.l.b16 %v1290
        %v1361 = vunpack.c.l.b16 %v1291
        %v1362 = vunpack.c.l.b16 %v1292
        %v1363 = vunpack.c.l.b16 %v1293
        %v1364 = vunpack.c.l.b16 %v1294
        %v1365 = vpack.c.b16 %v1334, %v1333
        %v1366 = vpack.c.b16 %v1336, %v1335
        %v1367 = vpack.c.b16 %v1338, %v1337
        %v1368 = vpack.c.b16 %v1340, %v1339
        %v1369 = vpack.c.b16 %v1342, %v1341
        %v1370 = vpack.c.b16 %v1344, %v1343
        %v1371 = vpack.c.b16 %v1346, %v1345
        %v1372 = vpack.c.b16 %v1348, %v1347
        %v1373 = vpack.c.b16 %v1350, %v1349
        %v1374 = vpack.c.b16 %v1352, %v1351
        %v1375 = vpack.c.b16 %v1354, %v1353
        %v1376 = vpack.c.b16 %v1356, %v1355
        %v1377 = vpack.c.b16 %v1358, %v1357
        %v1378 = vpack.c.b16 %v1360, %v1359
        %v1379 = vpack.c.b16 %v1362, %v1361
        %v1380 = vpack.c.b16 %v1364, %v1363
        %1397 = vmatpush.bf16.msra.mxu0 %v1372
        %1398 = vmatpush.bf16.msra.mxu0 %v1371
        %1399 = vmatpush.bf16.msra.mxu0 %v1370
        %1400 = vmatpush.bf16.msra.mxu0 %v1369
        %1401 = vmatpush.bf16.msra.mxu0 %v1368
        %1402 = vmatpush.bf16.msra.mxu0 %v1367
        %1403 = vmatpush.bf16.msra.mxu0 %v1366
        %1404 = vmatpush.bf16.msra.mxu0 %v1365
        %1405 = vmatmul.bf16.gmra.mxu0 %v1295
        %v1406 = vpop.f32.mrf.mxu0
        %v1407 = vadd.f32 %v1299, %v1406
        %v1408 = vpop.f32.mrf.mxu0
        %1409 = vdwg.mxu0
        %1410 = vmatpush.bf16.msra.mxu0 %v1380
        %1411 = vmatpush.bf16.msra.mxu0 %v1379
        %1412 = vmatpush.bf16.msra.mxu0 %v1378
        %1413 = vmatpush.bf16.msra.mxu0 %v1377
        %1414 = vmatpush.bf16.msra.mxu0 %v1376
        %1415 = vmatpush.bf16.msra.mxu0 %v1375
        %1416 = vmatpush.bf16.msra.mxu0 %v1374
        %1417 = vmatpush.bf16.msra.mxu0 %v1373
        %1418 = vmatmul.bf16.gmra.mxu0 %v1296
        %v1419 = vpop.f32.mrf.mxu0
        %v1420 = vadd.f32 %v1407, %v1419
        %v1421 = vpop.f32.mrf.mxu0
        %1422 = vdwg.mxu0
        %v1423 = vmax.f32 %v1420, 0.0
        %v1424 = vadd.f32 %v1144, %v1423
        %1425 = vst.msk [vmem:[#allocation2] sm:$0xff] %vm721, %v1424
        %p1426 = scmp.eq.s32.totalorder %s35, 7
        // Predicated region
        $region89: #{tpu_custom_call.1} parent=83 // pred_check
          %p1427 = pneg %p1426
        $region90: #{tpu_custom_call.1} parent=83 // pred_check_branch
          %1429 = sbr.rel (%p1427) target = $region92
        $region91: #{tpu_custom_call.1} parent=83 // pred_region
          %v1430 = vld [vmem:[#allocation2] sm:$0xff]
          %v1431 = vld [vmem:[%s12] sm:$0x1]
          %v1432 = vld [vmem:[%s13] sm:$0x1]
          %v1433 = vsel %vm721, %v1430, 0.0
          %1434 = vadd.xlane.f32.xlu0 %v1433
          %v1435 = vpop.xlane.xlu0 %1434
          %v1436 = vmul.f32 %v1435, %v731
          %v1437 = vsub.f32 %v1430, %v1436
          %v1438 = vmul.f32 %v1437, %v1437
          %v1439 = vsel %vm721, %v1438, 0.0
          %1440 = vadd.xlane.f32.xlu0 %v1439
          %v1441 = vpop.xlane.xlu0 %1440
          %v1442 = vmul.f32 %v1441, %v731
          %v1443 = vadd.f32 %v1442, 1e-05
          %v1444 = vrsqrt.pop %v1443
          %v1445 = vmul.f32 %v1444, %v1443
          %v1446 = vmul.f32 %v1445, %v1444
          %v1447 = vmul.f32 0.5, %v1446
          %v1448 = vsub.f32 1.5, %v1447
          %v1449 = vmul.f32 %v1444, %v1448
          %vm1450 = vweird.f32 %v1443
          %vm1451 = vweird.f32 %v1444
          %vm1452 = vmor %vm1450, %vm1451
          %v1453 = vsel %vm1452, %v1444, %v1449
          %v1454 = vmul.f32 %v1437, %v1453
          %v1456 = vperm.slane %v1431, 0
          %v1458 = vmul.f32 %v1454, %v1456
          %v1460 = vperm.slane %v1432, 0
          %v1462 = vadd.f32 %v1458, %v1460
          %v1463 = vld [vmem:[%s14] sm:$0xff]
          %v1464 = vld [vmem:[%s14 + $0x8] sm:$0xf]
          %v1465 = vld [vmem:[%s14 + $0xc] sm:$0xff]
          %v1466 = vld [vmem:[%s14 + $0x14] sm:$0xf]
          %v1467 = vld [vmem:[%s14 + $0x18] sm:$0xff]
          %v1468 = vld [vmem:[%s14 + $0x20] sm:$0xf]
          %v1469 = vld [vmem:[%s14 + $0x24] sm:$0xff]
          %v1470 = vld [vmem:[%s14 + $0x2c] sm:$0xf]
          %v1471 = vld [vmem:[%s14 + $0x30] sm:$0xff]
          %v1472 = vld [vmem:[%s14 + $0x38] sm:$0xf]
          %v1473 = vld [vmem:[%s14 + $0x3c] sm:$0xff]
          %v1474 = vld [vmem:[%s14 + $0x44] sm:$0xf]
          %v1475 = vld [vmem:[%s14 + $0x48] sm:$0xff]
          %v1476 = vld [vmem:[%s14 + $0x50] sm:$0xf]
          %v1477 = vld [vmem:[%s14 + $0x54] sm:$0xff]
          %v1478 = vld [vmem:[%s14 + $0x5c] sm:$0xf]
          %v1479 = vpack.c.bf16 %v1462, %v1462
          %v1480 = vld [vmem:[%s15] sm:$0x7]
          %v1482 = vperm.slane %v1480, 0
          %v1483 = vperm.slane %v1480, 1
          %v1484 = vperm.slane %v1480, 2
          %v1504 = vunpack.c.l.b16 %v1463
          %v1505 = vunpack.c.h.b16 %v1463
          %v1506 = vunpack.c.l.b16 %v1464
          %v1507 = vunpack.c.l.b16 %v1465
          %v1508 = vunpack.c.h.b16 %v1465
          %v1509 = vunpack.c.l.b16 %v1466
          %v1510 = vunpack.c.l.b16 %v1467
          %v1511 = vunpack.c.h.b16 %v1467
          %v1512 = vunpack.c.l.b16 %v1468
          %v1513 = vunpack.c.l.b16 %v1469
          %v1514 = vunpack.c.h.b16 %v1469
          %v1515 = vunpack.c.l.b16 %v1470
          %v1516 = vunpack.c.l.b16 %v1471
          %v1517 = vunpack.c.h.b16 %v1471
          %v1518 = vunpack.c.l.b16 %v1472
          %v1519 = vunpack.c.l.b16 %v1473
          %v1520 = vunpack.c.h.b16 %v1473
          %v1521 = vunpack.c.l.b16 %v1474
          %v1522 = vunpack.c.l.b16 %v1475
          %v1523 = vunpack.c.h.b16 %v1475
          %v1524 = vunpack.c.l.b16 %v1476
          %v1525 = vunpack.c.l.b16 %v1477
          %v1526 = vunpack.c.h.b16 %v1477
          %v1527 = vunpack.c.l.b16 %v1478
          %v1528 = vpack.c.b16 %v1507, %v1504
          %v1529 = vpack.c.b16 %v1508, %v1505
          %v1530 = vpack.c.b16 %v1509, %v1506
          %v1531 = vpack.c.b16 %v1513, %v1510
          %v1532 = vpack.c.b16 %v1514, %v1511
          %v1533 = vpack.c.b16 %v1515, %v1512
          %v1534 = vpack.c.b16 %v1519, %v1516
          %v1535 = vpack.c.b16 %v1520, %v1517
          %v1536 = vpack.c.b16 %v1521, %v1518
          %v1537 = vpack.c.b16 %v1525, %v1522
          %v1538 = vpack.c.b16 %v1526, %v1523
          %v1539 = vpack.c.b16 %v1527, %v1524
          %v1553 = vsel %vm721, %v1479, 0
          %1555 = vmatpush.bf16.msra.mxu0 0
          %1556 = vmatpush.bf16.msra.mxu0 0
          %1557 = vmatpush.bf16.msra.mxu0 0
          %1558 = vmatpush.bf16.msra.mxu0 0
          %1559 = vmatpush.bf16.msra.mxu0 %v1537
          %1560 = vmatpush.bf16.msra.mxu0 %v1534
          %1561 = vmatpush.bf16.msra.mxu0 %v1531
          %1562 = vmatpush.bf16.msra.mxu0 %v1528
          %1563 = vmatmul.bf16.gmra.mxu0 %v1553
          %v1564 = vpop.f32.mrf.mxu0
          %v1565 = vadd.f32 %v1482, %v1564
          %v1566 = vpop.f32.mrf.mxu0
          %1567 = vdwg.mxu0
          %1568 = vmatpush.bf16.msra.mxu0 0
          %1569 = vmatpush.bf16.msra.mxu0 0
          %1570 = vmatpush.bf16.msra.mxu0 0
          %1571 = vmatpush.bf16.msra.mxu0 0
          %1572 = vmatpush.bf16.msra.mxu0 %v1538
          %1573 = vmatpush.bf16.msra.mxu0 %v1535
          %1574 = vmatpush.bf16.msra.mxu0 %v1532
          %1575 = vmatpush.bf16.msra.mxu0 %v1529
          %1576 = vmatmul.bf16.gmra.mxu0 %v1553
          %v1577 = vpop.f32.mrf.mxu0
          %v1578 = vadd.f32 %v1483, %v1577
          %v1579 = vpop.f32.mrf.mxu0
          %1580 = vdwg.mxu0
          %1581 = vmatpush.bf16.msra.mxu0 0
          %1582 = vmatpush.bf16.msra.mxu0 0
          %1583 = vmatpush.bf16.msra.mxu0 0
          %1584 = vmatpush.bf16.msra.mxu0 0
          %1585 = vmatpush.bf16.msra.mxu0 %v1539
          %1586 = vmatpush.bf16.msra.mxu0 %v1536
          %1587 = vmatpush.bf16.msra.mxu0 %v1533
          %1588 = vmatpush.bf16.msra.mxu0 %v1530
          %1589 = vmatmul.bf16.gmra.mxu0 %v1553
          %v1590 = vpop.f32.mrf.mxu0
          %v1591 = vadd.f32 %v1484, %v1590
          %v1592 = vpop.f32.mrf.mxu0
          %1593 = vdwg.mxu0
          %1594 = vst [vmem:[%s663] sm:$0xff] %v1565
          %1595 = vst [vmem:[%s663 + $0x8] sm:$0xff] %v1578
          %1596 = vst [vmem:[%s663 + $0x10] sm:$0xff] %v1591
        $region92: #{tpu_custom_call.1} parent=83 // pred_fallthru
          _
        %s1597 = sand.u32 %s446, 1
        %s1598 = scalar_lea.sflag [#allocation4], %s1597
        %s1599 = sand.u32 %s446, 1
        %s1600 = smul.addr %s1599, 24
        %s1601 = scalar_lea.vmem [#allocation3], %s1600
        // Predicated region
        $region93: #{tpu_custom_call.1} parent=83 // pred_check
          %p1602 = pneg %p456
        $region94: #{tpu_custom_call.1} parent=83 // pred_check_branch
          %1604 = sbr.rel (%p1602) target = $region96
        $region95: #{tpu_custom_call.1} parent=83 // pred_region
          %1606 = vsyncadd %s1598, 0
          %s1607 = smul.addr %s34, 3
          %s1608 = smul.addr %s1607, 8
          %s1609 = scalar_lea.hbm %s16, %s1608
          %s1611 = sshll.u32 %s1601, 4
          %s1612 = int_to_ptr.vmem [resolvable:$true] %s1611
          %s1613 = sshll.u32 %s1609, 4
          %s1614 = int_to_ptr.hbm [resolvable:$true] %s1613
          %1616 = dma.vmem_to_hbm [thread:$0]  %s1612, 384, %s1614, %s1598
        $region96: #{tpu_custom_call.1} parent=83 // pred_fallthru
          _
      $region84: #{tpu_custom_call.1} parent=5 // pred_fallthru
        _
      %p1617 = scmp.le.s32.totalorder 2, %s25
      // Predicated region
      $region97: #{tpu_custom_call.1} parent=5 // pred_check
        %p1618 = pneg %p1617
      $region98: #{tpu_custom_call.1} parent=5 // pred_check_branch
        %1620 = sbr.rel (%p1618) target = $region100
      $region99: #{tpu_custom_call.1} parent=5 // pred_region
        %s1621 = ssub.s32 %s25, 2
        // Predicated region
        $region101: #{tpu_custom_call.1} parent=99 // pred_check
          %p1622 = pneg %p462
        $region102: #{tpu_custom_call.1} parent=99 // pred_check_branch
          %1624 = sbr.rel (%p1622) target = $region104
        $region103: #{tpu_custom_call.1} parent=99 // pred_region
          %s1625 = sand.u32 %s447, 1
          %s1626 = scalar_lea.sflag [#allocation4], %s1625
          %s1627 = sand.u32 %s447, 1
          %s1628 = smul.addr %s1627, 24
          %s1629 = scalar_lea.vmem [#allocation3], %s1628
          %1631 = dma.done %s1626, 384
        $region104: #{tpu_custom_call.1} parent=99 // pred_fallthru
          _
      $region100: #{tpu_custom_call.1} parent=5 // pred_fallthru
        _
    $region6: #{tpu_custom_call.1} parent=1 // loop_footer
      %s29 = sadd.s32 1, %s25
    $region7: #{tpu_custom_call.1} parent=1 // loop_footer_branch
      %24 = sbr.rel target = $region3
    $region8: #{tpu_custom_call.1} parent=1 // loop_exit
      _
    %1632 = vsyncpa [#allocation4], 1
    %s1633 = scalar_lea.sflag [#allocation4], 1
    %1634 = vsyncpa %s1633, 1

</llo_original>
